<compile_context>
chip_gen: v7x
topology: tpu7x:2x2x1
jax: 0.10.0
libtpu: 0.0.40
codegen_flags: <defaults>
</compile_context>

<pallas_src>
import jax
import jax.numpy as jnp
from jax import lax
from jax.experimental import pallas as pl
from jax.experimental.pallas import tpu as pltpu


# ---------------------------------------------------------------------------
# Pallas kernels
# ---------------------------------------------------------------------------
def _pointwise_conv_kernel(x_ref, w_ref, b_ref, o_ref):
    """1x1 conv on a (B, C_in, T) tile: o[b] = W @ x[b] + b, lane-dense in T."""
    w = w_ref[...].astype(jnp.float32)                        # (C_out, C_in)
    b = b_ref[...].astype(jnp.float32)                        # (C_out, 1)
    for bi in range(x_ref.shape[0]):                          # static batch loop
        x = x_ref[bi].astype(jnp.float32)                     # (C_in, T)
        y = jnp.dot(w, x, preferred_element_type=jnp.float32) + b
        o_ref[bi] = y.astype(o_ref.dtype)


def _gate_kernel(x_ref, c1_ref, v_ref, up_ref, wf_ref, bf_ref, w4_ref, b4_ref,
                 o_ref):
    """Fused ESA tail on a spatial tile T:
       cf  = Wf @ c1 + bf                      (conv_f, 1x1)
       c3  = v_small @ up                      (bilinear upsample as matmul)
       out = x * sigmoid(W4 @ (c3 + cf) + b4)  (conv4 + sigmoid + gate)
    """
    up = up_ref[...].astype(jnp.float32)                      # (hws, T)
    wf = wf_ref[...].astype(jnp.float32)                      # (f, f)
    bf = bf_ref[...].astype(jnp.float32)                      # (f, 1)
    w4 = w4_ref[...].astype(jnp.float32)                      # (C, f)
    b4 = b4_ref[...].astype(jnp.float32)                      # (C, 1)
    for bi in range(x_ref.shape[0]):                          # static batch loop
        c1 = c1_ref[bi].astype(jnp.float32)                   # (f, T)
        vs = v_ref[bi].astype(jnp.float32)                    # (f, hws)
        c3 = jnp.dot(vs, up, preferred_element_type=jnp.float32)       # (f, T)
        cf = jnp.dot(wf, c1, preferred_element_type=jnp.float32) + bf  # (f, T)
        logits = jnp.dot(w4, c3 + cf,
                         preferred_element_type=jnp.float32) + b4      # (C, T)
        gate = jax.nn.sigmoid(logits)
        o_ref[bi] = (x_ref[bi].astype(jnp.float32) * gate).astype(o_ref.dtype)


# ---------------------------------------------------------------------------
# Tiling helper
# ---------------------------------------------------------------------------
def _spatial_tiling(hw, max_tile=8192):
    """Return (padded_hw, tile): lane-dense tiling with >=2 blocks when possible."""
    if hw % 128 != 0:
        if hw <= max_tile:
            return hw, hw                 # small full-extent tile is legal & cheap
        hw_pad = -(-hw // 128) * 128      # pad so we can tile lane-dense
    else:
        hw_pad = hw
    t = min(hw_pad, max_tile)
    t -= t % 128
    while t >= 128 and hw_pad % t != 0:
        t -= 128
    if t < 128:
        t = hw_pad
    # Prefer >=2 grid blocks so both v7x TensorCores get work.
    if t == hw_pad and hw_pad > 128:
        t2 = hw_pad // 2
        t2 -= t2 % 128
        while t2 >= 128 and hw_pad % t2 != 0:
            t2 -= 128
        if t2 >= 128:
            t = t2
    return hw_pad, t


# ---------------------------------------------------------------------------
# Pallas wrappers
# ---------------------------------------------------------------------------
def pointwise_conv(x, w, b, *, max_tile=8192):
    """1x1 conv over an NCHW tensor via a Pallas channel-mixing matmul.

    `w` may be (cout, cin, 1, 1) or (cout, cin)."""
    B, cin = x.shape[0], x.shape[1]
    spatial = x.shape[2:]
    hw = 1
    for s in spatial:
        hw *= s
    cout = w.shape[0]
    hw_pad, t = _spatial_tiling(hw, max_tile)
    x3 = x.reshape(B, cin, hw)
    if hw_pad != hw:
        x3 = jnp.pad(x3, ((0, 0), (0, 0), (0, hw_pad - hw)))
    w2 = w.reshape(cout, -1)
    b2 = b.reshape(cout, 1)
    out = pl.pallas_call(
        _pointwise_conv_kernel,
        out_shape=jax.ShapeDtypeStruct((B, cout, hw_pad), x.dtype),
        grid_spec=pl.GridSpec(
            grid=(hw_pad // t,),
            in_specs=[
                pl.BlockSpec((B, cin, t), lambda j: (0, 0, j)),
                pl.BlockSpec((cout, cin), lambda j: (0, 0)),
                pl.BlockSpec((cout, 1), lambda j: (0, 0)),
            ],
            out_specs=pl.BlockSpec((B, cout, t), lambda j: (0, 0, j)),
        ),
        compiler_params=pltpu.CompilerParams(
            dimension_semantics=("parallel",)),
    )(x3, w2, b2)
    if hw_pad != hw:
        out = out[..., :hw]
    return out.reshape((B, cout) + spatial)


def fused_sigmoid_gate(x, c1, v_small, up, wf, bf, w4, b4, *, max_tile=8192):
    """out = x * sigmoid(conv4(upsample(v_small) + conv_f(c1))) in one kernel.

    v_small: (B, f, hws) downsampled branch sum; up: (hws, H*W) bilinear matrix."""
    B, C, H, W = x.shape
    f = c1.shape[1]
    hw = H * W
    hws = v_small.shape[-1]
    hw_pad, t = _spatial_tiling(hw, max_tile)
    x3 = x.reshape(B, C, hw)
    c13 = c1.reshape(B, f, hw)
    if hw_pad != hw:
        pad = hw_pad - hw
        x3 = jnp.pad(x3, ((0, 0), (0, 0), (0, pad)))
        c13 = jnp.pad(c13, ((0, 0), (0, 0), (0, pad)))
        up = jnp.pad(up, ((0, 0), (0, pad)))
    wf2 = wf.reshape(f, f)
    bf2 = bf.reshape(f, 1)
    w42 = w4.reshape(C, f)
    b42 = b4.reshape(C, 1)
    out = pl.pallas_call(
        _gate_kernel,
        out_shape=jax.ShapeDtypeStruct((B, C, hw_pad), x.dtype),
        grid_spec=pl.GridSpec(
            grid=(hw_pad // t,),
            in_specs=[
                pl.BlockSpec((B, C, t), lambda j: (0, 0, j)),     # x
                pl.BlockSpec((B, f, t), lambda j: (0, 0, j)),     # c1_
                pl.BlockSpec((B, f, hws), lambda j: (0, 0, 0)),   # v_small (tiny)
                pl.BlockSpec((hws, t), lambda j: (0, j)),         # upsample matrix
                pl.BlockSpec((f, f), lambda j: (0, 0)),
                pl.BlockSpec((f, 1), lambda j: (0, 0)),
                pl.BlockSpec((C, f), lambda j: (0, 0)),
                pl.BlockSpec((C, 1), lambda j: (0, 0)),
            ],
            out_specs=pl.BlockSpec((B, C, t), lambda j: (0, 0, j)),
        ),
        compiler_params=pltpu.CompilerParams(
            dimension_semantics=("parallel",)),
    )(x3, c13, v_small, up, wf2, bf2, w42, b42)
    if hw_pad != hw:
        out = out[..., :hw]
    return out.reshape(B, C, H, W)


# ---------------------------------------------------------------------------
# Pure-JAX reference for the Pallas-covered pieces (used for verification)
# ---------------------------------------------------------------------------
def pointwise_conv_ref(x, w, b):
    cout, cin = w.shape[0], w.shape[1]
    y = jnp.einsum("bchw,oc->bohw", x, w.reshape(cout, cin))
    return y + b.reshape(1, -1, 1, 1)


# ---------------------------------------------------------------------------
# Non-Pallas building blocks (XLA / lax)
# TODO(synk): strided reflect-pad convs, depthwise MRConv convs, max pooling
# and the windowed unbiased variance have no clean/profitable Pallas
# formulation at these tiny spatial sizes; they are left to XLA.
# ---------------------------------------------------------------------------
def _conv2d(x, w, b, *, stride=1, padding="SAME", groups=1):
    y = lax.conv_general_dilated(
        x, w, window_strides=(stride, stride), padding=padding,
        dimension_numbers=("NCHW", "OIHW", "NCHW"),
        feature_group_count=groups)
    return y + b.reshape(1, -1, 1, 1)


def _conv3x3_reflect_s2(x, p):
    xp = jnp.pad(x, ((0, 0), (0, 0), (1, 1), (1, 1)), mode="reflect")
    return _conv2d(xp, p["w"], p["b"], stride=2, padding="VALID")


def _maxpool(x, ksize, stride, pad):
    return lax.reduce_window(
        x, -jnp.inf, lax.max,
        window_dimensions=(1, 1, ksize, ksize),
        window_strides=(1, 1, stride, stride),
        padding=((0, 0), (0, 0), (pad, pad), (pad, pad)))


def get_local_weights(residual, ksize, padding):
    """torch.var(unfold, unbiased=True) over ksize x ksize windows, stride 3."""
    rp = jnp.pad(residual,
                 ((0, 0), (0, 0), (padding, padding), (padding, padding)),
                 mode="reflect")
    win = (1, 1, ksize, ksize)
    strides = (1, 1, 3, 3)
    n = float(ksize * ksize)
    s = lax.reduce_window(rp, 0.0, lax.add, win, strides, "VALID")
    s2 = lax.reduce_window(rp * rp, 0.0, lax.add, win, strides, "VALID")
    return (s2 - s * s / n) / (n - 1.0)


def _gelu(x):
    return jax.nn.gelu(x, approximate=False)   # nn.GELU() default (exact erf)


def _bilinear_matrix(hs, ws, H, W):
    """(hs*ws, H*W) matrix M with bilinear_resize(v) == v_flat @ M (per channel).

    Built by resizing identity bases, so it matches jax.image.resize exactly
    (PyTorch F.interpolate(align_corners=False) uses the same half-pixel rule)."""
    uh = jax.image.resize(jnp.eye(hs, dtype=jnp.float32), (H, hs), method="bilinear")
    uw = jax.image.resize(jnp.eye(ws, dtype=jnp.float32), (W, ws), method="bilinear")
    return jnp.kron(uh, uw).T                  # (hs*ws, H*W)


# ---------------------------------------------------------------------------
# MRConv
# ---------------------------------------------------------------------------
def mrconv_forward(p, x, *, use_pallas=True):
    """Single-branch MRConv (reference / unequal-shape fallback)."""
    pw = pointwise_conv if use_pallas else pointwise_conv_ref
    groups = x.shape[1] // 3
    out = pw(x, p["conv1"]["w"], p["conv1"]["b"])
    o1, o2, o3 = jnp.split(out, 3, axis=1)
    s1 = _gelu(_conv2d(o1, p["conv2_1"]["w"], p["conv2_1"]["b"], groups=groups))
    s2 = _gelu(_conv2d(o2 + s1, p["conv2_2"]["w"], p["conv2_2"]["b"], groups=groups))
    s3 = _gelu(_conv2d(o3 + s2, p["conv2_3"]["w"], p["conv2_3"]["b"], groups=groups))
    out = jnp.concatenate([s1, s2, s3], axis=1) + x
    return _gelu(out)


def mrconv_pair_forward(pa, pb, x_pair):
    """Run two independent MRConv branches (same shapes, different weights)
    in one pass.  x_pair: (B, 2, dim, H, W) -> (B, 2, dim, H, W).

    The two 1x1 mixers become one block-diagonal Pallas matmul; the depthwise
    convs of both branches run as a single grouped lax conv."""
    B, _, dim, H, W = x_pair.shape
    g = dim // 3
    wa = pa["conv1"]["w"].reshape(dim, dim)
    wb = pb["conv1"]["w"].reshape(dim, dim)
    w_bd = jax.scipy.linalg.block_diag(wa, wb)                     # (2*dim, 2*dim)
    b_bd = jnp.concatenate([pa["conv1"]["b"], pb["conv1"]["b"]])
    out = pointwise_conv(x_pair.reshape(B, 2 * dim, H, W), w_bd, b_bd)
    out = out.reshape(B, 2, dim, H, W)

    def dw_pair(name, inp):
        w = jnp.concatenate([pa[name]["w"], pb[name]["w"]], axis=0)   # (2g,1,kh,kw)
        b = jnp.concatenate([pa[name]["b"], pb[name]["b"]], axis=0)
        y = _conv2d(inp.reshape(B, 2 * g, H, W), w, b, groups=2 * g)
        return _gelu(y).reshape(B, 2, g, H, W)

    o1, o2, o3 = out[:, :, :g], out[:, :, g:2 * g], out[:, :, 2 * g:]
    s1 = dw_pair("conv2_1", o1)
    s2 = dw_pair("conv2_2", o2 + s1)
    s3 = dw_pair("conv2_3", o3 + s2)
    out = jnp.concatenate([s1, s2, s3], axis=2) + x_pair
    return _gelu(out)


# ---------------------------------------------------------------------------
# ESA forward
# ---------------------------------------------------------------------------
def esa_forward(p, x, *, use_pallas=True):
    B, C, H, W = x.shape
    pw = pointwise_conv if use_pallas else pointwise_conv_ref

    c1_ = pw(x, p["conv1"]["w"], p["conv1"]["b"])

    c1_1 = _maxpool(_conv3x3_reflect_s2(c1_, p["conv2_1"]), 5, 3, 1)
    c1_2 = _maxpool(_conv3x3_reflect_s2(c1_, p["conv2_2"]), 7, 3, 1)
    c1_3 = get_local_weights(_conv3x3_reflect_s2(c1_, p["conv2_3"]), 7, padding=1)
    c1_4 = get_local_weights(_conv3x3_reflect_s2(c1_, p["conv2_4"]), 5, padding=1)

    in1 = c1_1 + c1_4
    in2 = c1_2 + c1_3
    f = c1_.shape[1]

    if use_pallas and in1.shape == in2.shape:
        # Batch the two independent MRConv chains along a branch axis.
        pair = jnp.stack([in1, in2], axis=1)                     # (B, 2, f, Hs, Ws)
        pair = jax.nn.relu(mrconv_pair_forward(p["conv_max_1"], p["conv_max_2"], pair))
        pair = mrconv_pair_forward(p["conv3_1"], p["conv3_2"], pair)
        v1, v2 = pair[:, 0], pair[:, 1]
    else:
        v1 = mrconv_forward(
            p["conv3_1"],
            jax.nn.relu(mrconv_forward(p["conv_max_1"], in1, use_pallas=use_pallas)),
            use_pallas=use_pallas)
        v2 = mrconv_forward(
            p["conv3_2"],
            jax.nn.relu(mrconv_forward(p["conv_max_2"], in2, use_pallas=use_pallas)),
            use_pallas=use_pallas)

    if use_pallas:
        # Bilinear upsample as a matmul, fused (with conv_f/conv4/sigmoid/gate)
        # into a single Pallas kernel.  Resize is linear, so when the two branch
        # outputs share a shape we sum first and upsample once.
        if v1.shape == v2.shape:
            hs, ws = v1.shape[-2:]
            v_small = (v1 + v2).reshape(B, f, hs * ws)
            up = _bilinear_matrix(hs, ws, H, W)
        else:
            h1, w1 = v1.shape[-2:]
            h2, w2 = v2.shape[-2:]
            v_small = jnp.concatenate(
                [v1.reshape(B, f, h1 * w1), v2.reshape(B, f, h2 * w2)], axis=-1)
            up = jnp.concatenate(
                [_bilinear_matrix(h1, w1, H, W), _bilinear_matrix(h2, w2, H, W)],
                axis=0)
        return fused_sigmoid_gate(x, c1_, v_small, up,
                                  p["conv_f"]["w"], p["conv_f"]["b"],
                                  p["conv4"]["w"], p["conv4"]["b"])

    # Pure-JAX reference path (mirrors the PyTorch module op-for-op).
    c3_1 = jax.image.resize(v1, (B, f, H, W), method="bilinear")
    c3_2 = jax.image.resize(v2, (B, f, H, W), method="bilinear")
    cf = pointwise_conv_ref(c1_, p["conv_f"]["w"], p["conv_f"]["b"])
    c4 = pointwise_conv_ref(c3_1 + c3_2 + cf, p["conv4"]["w"], p["conv4"]["b"])
    return x * jax.nn.sigmoid(c4)


# ---------------------------------------------------------------------------
# Parameter construction (mirrors the PyTorch module's layer shapes)
# ---------------------------------------------------------------------------
def _conv_params(key, cout, cin, kh, kw, scale=0.1):
    kw_key, kb_key = jax.random.split(key)
    return {
        "w": scale * jax.random.normal(kw_key, (cout, cin, kh, kw), jnp.float32),
        "b": scale * jax.random.normal(kb_key, (cout,), jnp.float32),
    }


def _mrconv_params(key, dim, ks=3):
    g = dim // 3           # depthwise: groups = in_dim // 3, 1 in-ch per group
    k1, k2, k3, k4 = jax.random.split(key, 4)
    return {
        "conv1": _conv_params(k1, dim, dim, 1, 1),
        "conv2_1": _conv_params(k2, g, 1, ks, ks),
        "conv2_2": _conv_params(k3, g, 1, 2 * ks - 1, ks),
        "conv2_3": _conv_params(k4, g, 1, ks, 2 * ks - 1),
    }


def init_esa_params(key, num_feat=24):
    f = num_feat // 4
    ks = jax.random.split(key, 11)
    return {
        "conv1": _conv_params(ks[0], f, num_feat, 1, 1),
        "conv_f": _conv_params(ks[1], f, f, 1, 1),
        "conv2_1": _conv_params(ks[2], f, f, 3, 3),
        "conv2_2": _conv_params(ks[3], f, f, 3, 3),
        "conv2_3": _conv_params(ks[4], f, f, 3, 3),
        "conv2_4": _conv_params(ks[5], f, f, 3, 3),
        "conv_max_1": _mrconv_params(ks[6], f),
        "conv_max_2": _mrconv_params(ks[7], f),
        "conv3_1": _mrconv_params(ks[8], f),
        "conv3_2": _mrconv_params(ks[9], f),
        "conv4": _conv_params(ks[10], num_feat, f, 1, 1),
    }


if __name__ == "__main__":
    key = jax.random.PRNGKey(0)
    kp, kx = jax.random.split(key)

    # ESA default num_feat=24 -> f=6 (divisible by 3 as MRConv requires).
    B, C, H, W = 2, 24, 16, 16
    x = jax.random.normal(kx, (B, C, H, W), dtype=jnp.float32)
    params = init_esa_params(kp, num_feat=C)

    esa_pallas = jax.jit(lambda p, v: esa_forward(p, v, use_pallas=True))
    esa_ref = jax.jit(lambda p, v: esa_forward(p, v, use_pallas=False))

    out = jax.block_until_ready(esa_pallas(params, x))
    ref = jax.block_until_ready(esa_ref(params, x))

    assert out.shape == x.shape
    max_err = float(jnp.max(jnp.abs(out - ref)))
    assert max_err < 1e-4, f"max abs err {max_err}"
    print("KERNEL_OK")
</pallas_src>

<mosaic_0001>
module attributes {stable_mosaic.version = 11 : i64} {
  func.func @_pointwise_conv_kernel(%arg0: i32, %arg1: memref<2x24x128xf32, #tpu.memory_space<vmem>>, %arg2: memref<6x24xf32, #tpu.memory_space<vmem>>, %arg3: memref<6x1xf32, #tpu.memory_space<vmem>>, %arg4: memref<2x6x128xf32, #tpu.memory_space<vmem>>) attributes {dimension_semantics = [#tpu.dimension_semantics<parallel>], iteration_bounds = array<i64: 2>, scalar_prefetch = 0 : i64, scratch_operands = 0 : i64, tpu.core_type = #tpu.core_type<tc>, window_params = [{transform_indices = @transform_0, window_bounds = array<i64: 2, 24, 128>}, {pipeline_mode = #tpu.pipeline_mode<synchronous>, transform_indices = @transform_1, window_bounds = array<i64: 6, 24>}, {pipeline_mode = #tpu.pipeline_mode<synchronous>, transform_indices = @transform_2, window_bounds = array<i64: 6, 1>}, {transform_indices = @transform_3, window_bounds = array<i64: 2, 6, 128>}]} {
    %c0 = arith.constant 0 : index
    %c0_0 = arith.constant 0 : index
    %0 = vector.load %arg2[%c0, %c0_0] : memref<6x24xf32, #tpu.memory_space<vmem>>, vector<6x24xf32>
    %c0_1 = arith.constant 0 : index
    %c0_2 = arith.constant 0 : index
    %1 = vector.load %arg3[%c0_1, %c0_2] : memref<6x1xf32, #tpu.memory_space<vmem>>, vector<6x1xf32>
    %c0_3 = arith.constant 0 : index
    %c0_4 = arith.constant 0 : index
    %c0_5 = arith.constant 0 : index
    %2 = vector.load %arg1[%c0_3, %c0_4, %c0_5] : memref<2x24x128xf32, #tpu.memory_space<vmem>>, vector<1x24x128xf32>
    %3 = vector.shape_cast %2 : vector<1x24x128xf32> to vector<24x128xf32>
    %cst = arith.constant dense<0.000000e+00> : vector<6x128xf32>
    %4 = tpu.matmul %0, %3, %cst {dimension_numbers = #tpu.dot_dimension_numbers<[1], [0], [0], [1], [0, 0, 1, 1], [], []>} : vector<6x24xf32>, vector<24x128xf32>, vector<6x128xf32> -> vector<6x128xf32>
    %5 = vector.broadcast %1 : vector<6x1xf32> to vector<6x128xf32>
    %6 = arith.addf %4, %5 : vector<6x128xf32>
    %c0_6 = arith.constant 0 : index
    %c0_7 = arith.constant 0 : index
    %c0_8 = arith.constant 0 : index
    %7 = vector.load %arg4[%c0_6, %c0_7, %c0_8] : memref<2x6x128xf32, #tpu.memory_space<vmem>>, vector<1x6x128xf32>
    %8 = vector.shape_cast %7 : vector<1x6x128xf32> to vector<6x128xf32>
    %9 = vector.shape_cast %6 : vector<6x128xf32> to vector<1x6x128xf32>
    tpu.vector_store %arg4[%c0_6, %c0_7, %c0_8], %9 {strides = array<i32>} : memref<2x6x128xf32, #tpu.memory_space<vmem>>, vector<1x6x128xf32>,
    %c1 = arith.constant 1 : index
    %c0_9 = arith.constant 0 : index
    %c0_10 = arith.constant 0 : index
    %10 = vector.load %arg1[%c1, %c0_9, %c0_10] : memref<2x24x128xf32, #tpu.memory_space<vmem>>, vector<1x24x128xf32>
    %11 = vector.shape_cast %10 : vector<1x24x128xf32> to vector<24x128xf32>
    %cst_11 = arith.constant dense<0.000000e+00> : vector<6x128xf32>
    %12 = tpu.matmul %0, %11, %cst_11 {dimension_numbers = #tpu.dot_dimension_numbers<[1], [0], [0], [1], [0, 0, 1, 1], [], []>} : vector<6x24xf32>, vector<24x128xf32>, vector<6x128xf32> -> vector<6x128xf32>
    %13 = vector.broadcast %1 : vector<6x1xf32> to vector<6x128xf32>
    %14 = arith.addf %12, %13 : vector<6x128xf32>
    %c1_12 = arith.constant 1 : index
    %c0_13 = arith.constant 0 : index
    %c0_14 = arith.constant 0 : index
    %15 = vector.load %arg4[%c1_12, %c0_13, %c0_14] : memref<2x6x128xf32, #tpu.memory_space<vmem>>, vector<1x6x128xf32>
    %16 = vector.shape_cast %15 : vector<1x6x128xf32> to vector<6x128xf32>
    %17 = vector.shape_cast %14 : vector<6x128xf32> to vector<1x6x128xf32>
    tpu.vector_store %arg4[%c1_12, %c0_13, %c0_14], %17 {strides = array<i32>} : memref<2x6x128xf32, #tpu.memory_space<vmem>>, vector<1x6x128xf32>,
    return
  }
  func.func @transform_0(%arg0: i32) -> (i32, i32, i32) {
    %c0_i32 = arith.constant 0 : i32
    %c0_i32_0 = arith.constant 0 : i32
    %c0_i32_1 = arith.constant 0 : i32
    return %c0_i32, %c0_i32_0, %arg0 : i32, i32, i32
  }
  func.func @transform_1(%arg0: i32) -> (i32, i32) {
    %c0_i32 = arith.constant 0 : i32
    %c0_i32_0 = arith.constant 0 : i32
    %c0_i32_1 = arith.constant 0 : i32
    return %c0_i32, %c0_i32_0 : i32, i32
  }
  func.func @transform_2(%arg0: i32) -> (i32, i32) {
    %c0_i32 = arith.constant 0 : i32
    %c0_i32_0 = arith.constant 0 : i32
    %c0_i32_1 = arith.constant 0 : i32
    return %c0_i32, %c0_i32_0 : i32, i32
  }
  func.func @transform_3(%arg0: i32) -> (i32, i32, i32) {
    %c0_i32 = arith.constant 0 : i32
    %c0_i32_0 = arith.constant 0 : i32
    %c0_i32_1 = arith.constant 0 : i32
    return %c0_i32, %c0_i32_0, %arg0 : i32, i32, i32
  }
}

module attributes {stable_mosaic.version = 11 : i64} {
  func.func @_pointwise_conv_kernel(%arg0: i32, %arg1: memref<2x12x4xf32, #tpu.memory_space<vmem>>, %arg2: memref<12x12xf32, #tpu.memory_space<vmem>>, %arg3: memref<12x1xf32, #tpu.memory_space<vmem>>, %arg4: memref<2x12x4xf32, #tpu.memory_space<vmem>>) attributes {dimension_semantics = [#tpu.dimension_semantics<parallel>], iteration_bounds = array<i64: 1>, scalar_prefetch = 0 : i64, scratch_operands = 0 : i64, tpu.core_type = #tpu.core_type<tc>, window_params = [{transform_indices = @transform_0, window_bounds = array<i64: 2, 12, 4>}, {pipeline_mode = #tpu.pipeline_mode<synchronous>, transform_indices = @transform_1, window_bounds = array<i64: 12, 12>}, {pipeline_mode = #tpu.pipeline_mode<synchronous>, transform_indices = @transform_2, window_bounds = array<i64: 12, 1>}, {transform_indices = @transform_3, window_bounds = array<i64: 2, 12, 4>}]} {
    %c0 = arith.constant 0 : index
    %c0_0 = arith.constant 0 : index
    %0 = vector.load %arg2[%c0, %c0_0] : memref<12x12xf32, #tpu.memory_space<vmem>>, vector<12x12xf32>
    %c0_1 = arith.constant 0 : index
    %c0_2 = arith.constant 0 : index
    %1 = vector.load %arg3[%c0_1, %c0_2] : memref<12x1xf32, #tpu.memory_space<vmem>>, vector<12x1xf32>
    %c0_3 = arith.constant 0 : index
    %c0_4 = arith.constant 0 : index
    %c0_5 = arith.constant 0 : index
    %2 = vector.load %arg1[%c0_3, %c0_4, %c0_5] : memref<2x12x4xf32, #tpu.memory_space<vmem>>, vector<1x12x4xf32>
    %3 = vector.shape_cast %2 : vector<1x12x4xf32> to vector<12x4xf32>
    %cst = arith.constant dense<0.000000e+00> : vector<12x4xf32>
    %4 = tpu.matmul %0, %3, %cst {dimension_numbers = #tpu.dot_dimension_numbers<[1], [0], [0], [1], [0, 0, 1, 1], [], []>} : vector<12x12xf32>, vector<12x4xf32>, vector<12x4xf32> -> vector<12x4xf32>
    %5 = vector.broadcast %1 : vector<12x1xf32> to vector<12x4xf32>
    %6 = arith.addf %4, %5 : vector<12x4xf32>
    %c0_6 = arith.constant 0 : index
    %c0_7 = arith.constant 0 : index
    %c0_8 = arith.constant 0 : index
    %7 = vector.load %arg4[%c0_6, %c0_7, %c0_8] : memref<2x12x4xf32, #tpu.memory_space<vmem>>, vector<1x12x4xf32>
    %8 = vector.shape_cast %7 : vector<1x12x4xf32> to vector<12x4xf32>
    %9 = vector.shape_cast %6 : vector<12x4xf32> to vector<1x12x4xf32>
    tpu.vector_store %arg4[%c0_6, %c0_7, %c0_8], %9 {strides = array<i32>} : memref<2x12x4xf32, #tpu.memory_space<vmem>>, vector<1x12x4xf32>,
    %c1 = arith.constant 1 : index
    %c0_9 = arith.constant 0 : index
    %c0_10 = arith.constant 0 : index
    %10 = vector.load %arg1[%c1, %c0_9, %c0_10] : memref<2x12x4xf32, #tpu.memory_space<vmem>>, vector<1x12x4xf32>
    %11 = vector.shape_cast %10 : vector<1x12x4xf32> to vector<12x4xf32>
    %cst_11 = arith.constant dense<0.000000e+00> : vector<12x4xf32>
    %12 = tpu.matmul %0, %11, %cst_11 {dimension_numbers = #tpu.dot_dimension_numbers<[1], [0], [0], [1], [0, 0, 1, 1], [], []>} : vector<12x12xf32>, vector<12x4xf32>, vector<12x4xf32> -> vector<12x4xf32>
    %13 = vector.broadcast %1 : vector<12x1xf32> to vector<12x4xf32>
    %14 = arith.addf %12, %13 : vector<12x4xf32>
    %c1_12 = arith.constant 1 : index
    %c0_13 = arith.constant 0 : index
    %c0_14 = arith.constant 0 : index
    %15 = vector.load %arg4[%c1_12, %c0_13, %c0_14] : memref<2x12x4xf32, #tpu.memory_space<vmem>>, vector<1x12x4xf32>
    %16 = vector.shape_cast %15 : vector<1x12x4xf32> to vector<12x4xf32>
    %17 = vector.shape_cast %14 : vector<12x4xf32> to vector<1x12x4xf32>
    tpu.vector_store %arg4[%c1_12, %c0_13, %c0_14], %17 {strides = array<i32>} : memref<2x12x4xf32, #tpu.memory_space<vmem>>, vector<1x12x4xf32>,
    return
  }
  func.func @transform_0(%arg0: i32) -> (i32, i32, i32) {
    %c0_i32 = arith.constant 0 : i32
    %c0_i32_0 = arith.constant 0 : i32
    %c0_i32_1 = arith.constant 0 : i32
    return %c0_i32, %c0_i32_0, %arg0 : i32, i32, i32
  }
  func.func @transform_1(%arg0: i32) -> (i32, i32) {
    %c0_i32 = arith.constant 0 : i32
    %c0_i32_0 = arith.constant 0 : i32
    %c0_i32_1 = arith.constant 0 : i32
    return %c0_i32, %c0_i32_0 : i32, i32
  }
  func.func @transform_2(%arg0: i32) -> (i32, i32) {
    %c0_i32 = arith.constant 0 : i32
    %c0_i32_0 = arith.constant 0 : i32
    %c0_i32_1 = arith.constant 0 : i32
    return %c0_i32, %c0_i32_0 : i32, i32
  }
  func.func @transform_3(%arg0: i32) -> (i32, i32, i32) {
    %c0_i32 = arith.constant 0 : i32
    %c0_i32_0 = arith.constant 0 : i32
    %c0_i32_1 = arith.constant 0 : i32
    return %c0_i32, %c0_i32_0, %arg0 : i32, i32, i32
  }
}

module attributes {stable_mosaic.version = 11 : i64} {
  func.func @_gate_kernel(%arg0: i32, %arg1: memref<2x24x128xf32, #tpu.memory_space<vmem>>, %arg2: memref<2x6x128xf32, #tpu.memory_space<vmem>>, %arg3: memref<2x6x4xf32, #tpu.memory_space<vmem>>, %arg4: memref<4x128xf32, #tpu.memory_space<vmem>>, %arg5: memref<6x6xf32, #tpu.memory_space<vmem>>, %arg6: memref<6x1xf32, #tpu.memory_space<vmem>>, %arg7: memref<24x6xf32, #tpu.memory_space<vmem>>, %arg8: memref<24x1xf32, #tpu.memory_space<vmem>>, %arg9: memref<2x24x128xf32, #tpu.memory_space<vmem>>) attributes {dimension_semantics = [#tpu.dimension_semantics<parallel>], iteration_bounds = array<i64: 2>, scalar_prefetch = 0 : i64, scratch_operands = 0 : i64, tpu.core_type = #tpu.core_type<tc>, window_params = [{transform_indices = @transform_0, window_bounds = array<i64: 2, 24, 128>}, {transform_indices = @transform_1, window_bounds = array<i64: 2, 6, 128>}, {pipeline_mode = #tpu.pipeline_mode<synchronous>, transform_indices = @transform_2, window_bounds = array<i64: 2, 6, 4>}, {transform_indices = @transform_3, window_bounds = array<i64: 4, 128>}, {pipeline_mode = #tpu.pipeline_mode<synchronous>, transform_indices = @transform_4, window_bounds = array<i64: 6, 6>}, {pipeline_mode = #tpu.pipeline_mode<synchronous>, transform_indices = @transform_5, window_bounds = array<i64: 6, 1>}, {pipeline_mode = #tpu.pipeline_mode<synchronous>, transform_indices = @transform_6, window_bounds = array<i64: 24, 6>}, {pipeline_mode = #tpu.pipeline_mode<synchronous>, transform_indices = @transform_7, window_bounds = array<i64: 24, 1>}, {transform_indices = @transform_8, window_bounds = array<i64: 2, 24, 128>}]} {
    %c0 = arith.constant 0 : index
    %c0_0 = arith.constant 0 : index
    %0 = vector.load %arg4[%c0, %c0_0] : memref<4x128xf32, #tpu.memory_space<vmem>>, vector<4x128xf32>
    %c0_1 = arith.constant 0 : index
    %c0_2 = arith.constant 0 : index
    %1 = vector.load %arg5[%c0_1, %c0_2] : memref<6x6xf32, #tpu.memory_space<vmem>>, vector<6x6xf32>
    %c0_3 = arith.constant 0 : index
    %c0_4 = arith.constant 0 : index
    %2 = vector.load %arg6[%c0_3, %c0_4] : memref<6x1xf32, #tpu.memory_space<vmem>>, vector<6x1xf32>
    %c0_5 = arith.constant 0 : index
    %c0_6 = arith.constant 0 : index
    %3 = vector.load %arg7[%c0_5, %c0_6] : memref<24x6xf32, #tpu.memory_space<vmem>>, vector<24x6xf32>
    %c0_7 = arith.constant 0 : index
    %c0_8 = arith.constant 0 : index
    %4 = vector.load %arg8[%c0_7, %c0_8] : memref<24x1xf32, #tpu.memory_space<vmem>>, vector<24x1xf32>
    %c0_9 = arith.constant 0 : index
    %c0_10 = arith.constant 0 : index
    %c0_11 = arith.constant 0 : index
    %5 = vector.load %arg2[%c0_9, %c0_10, %c0_11] : memref<2x6x128xf32, #tpu.memory_space<vmem>>, vector<1x6x128xf32>
    %6 = vector.shape_cast %5 : vector<1x6x128xf32> to vector<6x128xf32>
    %c0_12 = arith.constant 0 : index
    %c0_13 = arith.constant 0 : index
    %c0_14 = arith.constant 0 : index
    %7 = vector.load %arg3[%c0_12, %c0_13, %c0_14] : memref<2x6x4xf32, #tpu.memory_space<vmem>>, vector<1x6x4xf32>
    %8 = vector.shape_cast %7 : vector<1x6x4xf32> to vector<6x4xf32>
    %cst = arith.constant dense<0.000000e+00> : vector<6x128xf32>
    %9 = tpu.matmul %8, %0, %cst {dimension_numbers = #tpu.dot_dimension_numbers<[1], [0], [0], [1], [0, 0, 1, 1], [], []>} : vector<6x4xf32>, vector<4x128xf32>, vector<6x128xf32> -> vector<6x128xf32>
    %cst_15 = arith.constant dense<0.000000e+00> : vector<6x128xf32>
    %10 = tpu.matmul %1, %6, %cst_15 {dimension_numbers = #tpu.dot_dimension_numbers<[1], [0], [0], [1], [0, 0, 1, 1], [], []>} : vector<6x6xf32>, vector<6x128xf32>, vector<6x128xf32> -> vector<6x128xf32>
    %11 = vector.broadcast %2 : vector<6x1xf32> to vector<6x128xf32>
    %12 = arith.addf %10, %11 : vector<6x128xf32>
    %13 = arith.addf %9, %12 : vector<6x128xf32>
    %cst_16 = arith.constant dense<0.000000e+00> : vector<24x128xf32>
    %14 = tpu.matmul %3, %13, %cst_16 {dimension_numbers = #tpu.dot_dimension_numbers<[1], [0], [0], [1], [0, 0, 1, 1], [], []>} : vector<24x6xf32>, vector<6x128xf32>, vector<24x128xf32> -> vector<24x128xf32>
    %15 = vector.broadcast %4 : vector<24x1xf32> to vector<24x128xf32>
    %16 = arith.addf %14, %15 : vector<24x128xf32>
    %17 = arith.negf %16 : vector<24x128xf32>
    %18 = math.exp %17 : vector<24x128xf32>
    %cst_17 = arith.constant 1.000000e+00 : f32
    %19 = vector.broadcast %cst_17 : f32 to vector<24x128xf32>
    %20 = arith.addf %19, %18 : vector<24x128xf32>
    %21 = arith.divf %19, %20 : vector<24x128xf32>
    %c0_18 = arith.constant 0 : index
    %c0_19 = arith.constant 0 : index
    %c0_20 = arith.constant 0 : index
    %22 = vector.load %arg1[%c0_18, %c0_19, %c0_20] : memref<2x24x128xf32, #tpu.memory_space<vmem>>, vector<1x24x128xf32>
    %23 = vector.shape_cast %22 : vector<1x24x128xf32> to vector<24x128xf32>
    %24 = arith.mulf %23, %21 : vector<24x128xf32>
    %c0_21 = arith.constant 0 : index
    %c0_22 = arith.constant 0 : index
    %c0_23 = arith.constant 0 : index
    %25 = vector.load %arg9[%c0_21, %c0_22, %c0_23] : memref<2x24x128xf32, #tpu.memory_space<vmem>>, vector<1x24x128xf32>
    %26 = vector.shape_cast %25 : vector<1x24x128xf32> to vector<24x128xf32>
    %27 = vector.shape_cast %24 : vector<24x128xf32> to vector<1x24x128xf32>
    tpu.vector_store %arg9[%c0_21, %c0_22, %c0_23], %27 {strides = array<i32>} : memref<2x24x128xf32, #tpu.memory_space<vmem>>, vector<1x24x128xf32>,
    %c1 = arith.constant 1 : index
    %c0_24 = arith.constant 0 : index
    %c0_25 = arith.constant 0 : index
    %28 = vector.load %arg2[%c1, %c0_24, %c0_25] : memref<2x6x128xf32, #tpu.memory_space<vmem>>, vector<1x6x128xf32>
    %29 = vector.shape_cast %28 : vector<1x6x128xf32> to vector<6x128xf32>
    %c1_26 = arith.constant 1 : index
    %c0_27 = arith.constant 0 : index
    %c0_28 = arith.constant 0 : index
    %30 = vector.load %arg3[%c1_26, %c0_27, %c0_28] : memref<2x6x4xf32, #tpu.memory_space<vmem>>, vector<1x6x4xf32>
    %31 = vector.shape_cast %30 : vector<1x6x4xf32> to vector<6x4xf32>
    %cst_29 = arith.constant dense<0.000000e+00> : vector<6x128xf32>
    %32 = tpu.matmul %31, %0, %cst_29 {dimension_numbers = #tpu.dot_dimension_numbers<[1], [0], [0], [1], [0, 0, 1, 1], [], []>} : vector<6x4xf32>, vector<4x128xf32>, vector<6x128xf32> -> vector<6x128xf32>
    %cst_30 = arith.constant dense<0.000000e+00> : vector<6x128xf32>
    %33 = tpu.matmul %1, %29, %cst_30 {dimension_numbers = #tpu.dot_dimension_numbers<[1], [0], [0], [1], [0, 0, 1, 1], [], []>} : vector<6x6xf32>, vector<6x128xf32>, vector<6x128xf32> -> vector<6x128xf32>
    %34 = vector.broadcast %2 : vector<6x1xf32> to vector<6x128xf32>
    %35 = arith.addf %33, %34 : vector<6x128xf32>
    %36 = arith.addf %32, %35 : vector<6x128xf32>
    %cst_31 = arith.constant dense<0.000000e+00> : vector<24x128xf32>
    %37 = tpu.matmul %3, %36, %cst_31 {dimension_numbers = #tpu.dot_dimension_numbers<[1], [0], [0], [1], [0, 0, 1, 1], [], []>} : vector<24x6xf32>, vector<6x128xf32>, vector<24x128xf32> -> vector<24x128xf32>
    %38 = vector.broadcast %4 : vector<24x1xf32> to vector<24x128xf32>
    %39 = arith.addf %37, %38 : vector<24x128xf32>
    %40 = arith.negf %39 : vector<24x128xf32>
    %41 = math.exp %40 : vector<24x128xf32>
    %cst_32 = arith.constant 1.000000e+00 : f32
    %42 = vector.broadcast %cst_32 : f32 to vector<24x128xf32>
    %43 = arith.addf %42, %41 : vector<24x128xf32>
    %44 = arith.divf %42, %43 : vector<24x128xf32>
    %c1_33 = arith.constant 1 : index
    %c0_34 = arith.constant 0 : index
    %c0_35 = arith.constant 0 : index
    %45 = vector.load %arg1[%c1_33, %c0_34, %c0_35] : memref<2x24x128xf32, #tpu.memory_space<vmem>>, vector<1x24x128xf32>
    %46 = vector.shape_cast %45 : vector<1x24x128xf32> to vector<24x128xf32>
    %47 = arith.mulf %46, %44 : vector<24x128xf32>
    %c1_36 = arith.constant 1 : index
    %c0_37 = arith.constant 0 : index
    %c0_38 = arith.constant 0 : index
    %48 = vector.load %arg9[%c1_36, %c0_37, %c0_38] : memref<2x24x128xf32, #tpu.memory_space<vmem>>, vector<1x24x128xf32>
    %49 = vector.shape_cast %48 : vector<1x24x128xf32> to vector<24x128xf32>
    %50 = vector.shape_cast %47 : vector<24x128xf32> to vector<1x24x128xf32>
    tpu.vector_store %arg9[%c1_36, %c0_37, %c0_38], %50 {strides = array<i32>} : memref<2x24x128xf32, #tpu.memory_space<vmem>>, vector<1x24x128xf32>,
    return
  }
  func.func @transform_0(%arg0: i32) -> (i32, i32, i32) {
    %c0_i32 = arith.constant 0 : i32
    %c0_i32_0 = arith.constant 0 : i32
    %c0_i32_1 = arith.constant 0 : i32
    return %c0_i32, %c0_i32_0, %arg0 : i32, i32, i32
  }
  func.func @transform_1(%arg0: i32) -> (i32, i32, i32) {
    %c0_i32 = arith.constant 0 : i32
    %c0_i32_0 = arith.constant 0 : i32
    %c0_i32_1 = arith.constant 0 : i32
    return %c0_i32, %c0_i32_0, %arg0 : i32, i32, i32
  }
  func.func @transform_2(%arg0: i32) -> (i32, i32, i32) {
    %c0_i32 = arith.constant 0 : i32
    %c0_i32_0 = arith.constant 0 : i32
    %c0_i32_1 = arith.constant 0 : i32
    %c0_i32_2 = arith.constant 0 : i32
    return %c0_i32, %c0_i32_0, %c0_i32_1 : i32, i32, i32
  }
  func.func @transform_3(%arg0: i32) -> (i32, i32) {
    %c0_i32 = arith.constant 0 : i32
    %c0_i32_0 = arith.constant 0 : i32
    return %c0_i32, %arg0 : i32, i32
  }
  func.func @transform_4(%arg0: i32) -> (i32, i32) {
    %c0_i32 = arith.constant 0 : i32
    %c0_i32_0 = arith.constant 0 : i32
    %c0_i32_1 = arith.constant 0 : i32
    return %c0_i32, %c0_i32_0 : i32, i32
  }
  func.func @transform_5(%arg0: i32) -> (i32, i32) {
    %c0_i32 = arith.constant 0 : i32
    %c0_i32_0 = arith.constant 0 : i32
    %c0_i32_1 = arith.constant 0 : i32
    return %c0_i32, %c0_i32_0 : i32, i32
  }
  func.func @transform_6(%arg0: i32) -> (i32, i32) {
    %c0_i32 = arith.constant 0 : i32
    %c0_i32_0 = arith.constant 0 : i32
    %c0_i32_1 = arith.constant 0 : i32
    return %c0_i32, %c0_i32_0 : i32, i32
  }
  func.func @transform_7(%arg0: i32) -> (i32, i32) {
    %c0_i32 = arith.constant 0 : i32
    %c0_i32_0 = arith.constant 0 : i32
    %c0_i32_1 = arith.constant 0 : i32
    return %c0_i32, %c0_i32_0 : i32, i32
  }
  func.func @transform_8(%arg0: i32) -> (i32, i32, i32) {
    %c0_i32 = arith.constant 0 : i32
    %c0_i32_0 = arith.constant 0 : i32
    %c0_i32_1 = arith.constant 0 : i32
    return %c0_i32, %c0_i32_0, %arg0 : i32, i32, i32
  }
}

</mosaic_0001>

<llo_original>
// kernel: _lambda_.4
$region0: #{_lambda_.4}
  #allocation0 [shape = 'u32[]', space=smem, size = 0x4, offset = 0x4, fixed_abs, tag = 'smem constant byte address 0x4 - core index']
  #allocation1 [shape = 'u32[144,128]{1,0:T(1,128)}', space=vmem, size = 0x12000, scoped, tag = 'internal scratch']
  %s0 = inlined_call_operand.vmem [shape: f32[2,24,256], index: 0, kind: input, shape index: {}]
  %s1 = inlined_call_operand.vmem [shape: f32[6,24], index: 1, kind: input, shape index: {}]
  %s2 = inlined_call_operand.vmem [shape: f32[6,1], index: 2, kind: input, shape index: {}]
  %s3 = inlined_call_operand.vmem [shape: f32[2,6,256], index: 3, kind: output, shape index: {}]
  %s4 = sld [smem:[#allocation0]]
  $region117: #{_lambda_.4} parent=0
    _
  %s6 = ssub.s32 1, %s4
  %s7 = scalar_select 0, %s6, %s4
  $region1: #{_lambda_.4} parent=0
    #allocation2 [shape = 'u8[49152]{0}', space=vmem, size = 0xc000, scoped, tag = 'input window, operand 0']
    #allocation3 [shape = 'u8[16384]{0}', space=vmem, size = 0x4000, scoped, tag = 'output window, operand 0']
    loop: start=0, step=1, limit=4
    $region2: #{_lambda_.4} parent=1 // loop_pre_header
      _
    $region3: #{_lambda_.4} parent=1 // loop_header
      %s9 = sphi 0, %s13
      %p10 = scmp.ge.s32.totalorder %s9, 4
      %s19 = sphi 0, %s21
      %s22 = sphi 0, %s19
      %s23 = sphi 0, %s22
      %s39 = sphi 0, %s23
      %s43 = sphi 0, %s43
      %s45 = sphi 0, %s43
      %s46 = sphi 0, %s45
      %s60 = sphi 0, %s46
      %s64 = sphi 0, %s64
      %s66 = sphi 0, %s64
      %s67 = sphi 0, %s66
      %s81 = sphi 0, %s67
      %s87 = sphi 0, %s89
      %s90 = sphi 0, %s87
      %s91 = sphi 0, %s90
      %s107 = sphi 0, %s91
    $region4: #{_lambda_.4} parent=1 // loop_header_branch
      %12 = sbr.rel (%p10) target = $region8
    $region5: #{_lambda_.4} parent=1 // loop_body
      %s14 = ssub.s32 %s9, 1
      %s15 = ssub.s32 %s9, 2
      %s16 = sadd.s32 %s9, 1
      %s17 = ssub.s32 %s9, %s16
      %p18 = scmp.eq.s32.totalorder %s17, 0
      %s20 = sadd.s32 %s19, 1
      %s21 = scalar_select %p18, %s19, %s20
      %p24 = pneg %p18
      %p25 = scmp.eq.s32.totalorder %s9, 1
      %p26 = por %p24, %p25
      %p27 = scmp.ne.s32.totalorder %s19, %s22
      %p28 = scmp.eq.s32.totalorder %s9, 0
      %p29 = por %p27, %p28
      %p30 = scmp.ne.s32.totalorder %s19, %s22
      %p31 = scmp.eq.s32.totalorder %s14, 1
      %p32 = por %p30, %p31
      %p33 = scmp.ne.s32.totalorder %s22, %s23
      %p34 = scmp.eq.s32.totalorder %s14, 0
      %p35 = por %p33, %p34
      %p36 = scmp.ne.s32.totalorder %s22, %s23
      %p37 = scmp.eq.s32.totalorder %s15, 1
      %p38 = por %p36, %p37
      %p40 = scmp.ne.s32.totalorder %s23, %s39
      %p41 = scmp.eq.s32.totalorder %s15, 0
      %p42 = por %p40, %p41
      %s44 = sadd.s32 %s43, 1
      %p47 = scmp.eq.s32.totalorder %s9, 1
      %p48 = scmp.ne.s32.totalorder %s43, %s45
      %p49 = scmp.eq.s32.totalorder %s9, 0
      %p50 = por %p48, %p49
      %p51 = scmp.ne.s32.totalorder %s43, %s45
      %p52 = scmp.eq.s32.totalorder %s14, 1
      %p53 = por %p51, %p52
      %p54 = scmp.ne.s32.totalorder %s45, %s46
      %p55 = scmp.eq.s32.totalorder %s14, 0
      %p56 = por %p54, %p55
      %p57 = scmp.ne.s32.totalorder %s45, %s46
      %p58 = scmp.eq.s32.totalorder %s15, 1
      %p59 = por %p57, %p58
      %p61 = scmp.ne.s32.totalorder %s46, %s60
      %p62 = scmp.eq.s32.totalorder %s15, 0
      %p63 = por %p61, %p62
      %s65 = sadd.s32 %s64, 1
      %p68 = scmp.eq.s32.totalorder %s9, 1
      %p69 = scmp.ne.s32.totalorder %s64, %s66
      %p70 = scmp.eq.s32.totalorder %s9, 0
      %p71 = por %p69, %p70
      %p72 = scmp.ne.s32.totalorder %s64, %s66
      %p73 = scmp.eq.s32.totalorder %s14, 1
      %p74 = por %p72, %p73
      %p75 = scmp.ne.s32.totalorder %s66, %s67
      %p76 = scmp.eq.s32.totalorder %s14, 0
      %p77 = por %p75, %p76
      %p78 = scmp.ne.s32.totalorder %s66, %s67
      %p79 = scmp.eq.s32.totalorder %s15, 1
      %p80 = por %p78, %p79
      %p82 = scmp.ne.s32.totalorder %s67, %s81
      %p83 = scmp.eq.s32.totalorder %s15, 0
      %p84 = por %p82, %p83
      %s85 = ssub.s32 %s9, %s16
      %p86 = scmp.eq.s32.totalorder %s85, 0
      %s88 = sadd.s32 %s87, 1
      %s89 = scalar_select %p86, %s87, %s88
      %p92 = pneg %p86
      %p93 = scmp.eq.s32.totalorder %s9, 1
      %p94 = por %p92, %p93
      %p95 = scmp.ne.s32.totalorder %s87, %s90
      %p96 = scmp.eq.s32.totalorder %s9, 0
      %p97 = por %p95, %p96
      %p98 = scmp.ne.s32.totalorder %s87, %s90
      %p99 = scmp.eq.s32.totalorder %s14, 1
      %p100 = por %p98, %p99
      %p101 = scmp.ne.s32.totalorder %s90, %s91
      %p102 = scmp.eq.s32.totalorder %s14, 0
      %p103 = por %p101, %p102
      %p104 = scmp.ne.s32.totalorder %s90, %s91
      %p105 = scmp.eq.s32.totalorder %s15, 1
      %p106 = por %p104, %p105
      %p108 = scmp.ne.s32.totalorder %s91, %s107
      %p109 = scmp.eq.s32.totalorder %s15, 0
      %p110 = por %p108, %p109
      %p111 = scmp.le.s32.totalorder 1, %s9
      %p112 = scmp.lt.s32.totalorder %s9, 3
      %p113 = pnand %p111, %p112
      %p114 = pneg %p113
      // Predicated region
      $region9: #{_lambda_.4} parent=5 // pred_check
        _
      $region10: #{_lambda_.4} parent=5 // pred_check_branch
        %116 = sbr.rel (%p113) target = $region12
      $region11: #{_lambda_.4} parent=5 // pred_region
        %s117 = ssub.s32 %s9, 1
        // Predicated region
        $region13: #{_lambda_.4} parent=11 // pred_check
          %p118 = pneg %p56
        $region14: #{_lambda_.4} parent=11 // pred_check_branch
          %120 = sbr.rel (%p118) target = $region16
        $region15: #{_lambda_.4} parent=11 // pred_region
          _
        $region16: #{_lambda_.4} parent=11 // pred_fallthru
          _
        // Predicated region
        $region17: #{_lambda_.4} parent=11 // pred_check
          %p121 = pneg %p77
        $region18: #{_lambda_.4} parent=11 // pred_check_branch
          %123 = sbr.rel (%p121) target = $region20
        $region19: #{_lambda_.4} parent=11 // pred_region
          _
        $region20: #{_lambda_.4} parent=11 // pred_fallthru
          _
      $region12: #{_lambda_.4} parent=5 // pred_fallthru
        _
      %p124 = scmp.lt.s32.totalorder %s9, 2
      // Predicated region
      $region21: #{_lambda_.4} parent=5 // pred_check
        %p125 = pneg %p124
      $region22: #{_lambda_.4} parent=5 // pred_check_branch
        %127 = sbr.rel (%p125) target = $region24
      $region23: #{_lambda_.4} parent=5 // pred_region
        // Predicated region
        $region25: #{_lambda_.4} parent=23 // pred_check
          %p128 = pneg %p29
        $region26: #{_lambda_.4} parent=23 // pred_check_branch
          %130 = sbr.rel (%p128) target = $region28
        $region27: #{_lambda_.4} parent=23 // pred_region
          %s131 = sand.u32 %s19, 1
          %s132 = sand.u32 %s19, 1
          %s133 = smul.addr %s132, 48
          %s134 = scalar_lea.vmem [#allocation2], %s133
          %s135 = smul.addr %s9, 8
          %s136 = scalar_lea.vmem %s0, %s135
          // Predicated region
          $region29: #{_lambda_.4} parent=27 // pred_check
            _
          $region30: #{_lambda_.4} parent=27 // pred_check_branch
            %138 = sbr.rel (0) target = $region32
          $region31: #{_lambda_.4} parent=27 // pred_region
            // Predicated region
            $region33: #{_lambda_.4} parent=31 // pred_check
              _
            $region34: #{_lambda_.4} parent=31 // pred_check_branch
              %140 = sbr.rel (0) target = $region36
            $region35: #{_lambda_.4} parent=31 // pred_region
              // Predicated region
              $region48: #{_lambda_.4} parent=35 // pred_check
                _
              $region49: #{_lambda_.4} parent=35 // pred_check_branch
                %165 = sbr.rel (0) target = $region51
              $region50: #{_lambda_.4} parent=35 // pred_region
                loop: start=0, step=1, limit=1
                $region52: #{_lambda_.4} parent=50 // loop_pre_header
                  _
                $region53: #{_lambda_.4} parent=50 // loop_header
                  %s167 = sphi 0, %s171
                  %p168 = scmp.ge.s32.totalorder %s167, 1
                  %s172 = sphi %s136, %s136
                  %s173 = sphi %s134, %s134
                $region54: #{_lambda_.4} parent=50 // loop_header_branch
                  %170 = sbr.rel (%p168) target = $region58
                $region55: #{_lambda_.4} parent=50 // loop_body
                  %v174 = vld [vmem:[%s172] sm:$0xff]
                  %175 = vst [vmem:[%s173] sm:$0xff] %v174
                  %v176 = vld [vmem:[%s172 + $0x10] sm:$0xff]
                  %177 = vst [vmem:[%s173 + $0x8] sm:$0xff] %v176
                  %v178 = vld [vmem:[%s172 + $0x20] sm:$0xff]
                  %179 = vst [vmem:[%s173 + $0x10] sm:$0xff] %v178
                  %v180 = vld [vmem:[%s172 + $0x30] sm:$0xff]
                  %181 = vst [vmem:[%s173 + $0x18] sm:$0xff] %v180
                  %v182 = vld [vmem:[%s172 + $0x40] sm:$0xff]
                  %183 = vst [vmem:[%s173 + $0x20] sm:$0xff] %v182
                  %v184 = vld [vmem:[%s172 + $0x50] sm:$0xff]
                  %185 = vst [vmem:[%s173 + $0x28] sm:$0xff] %v184
                $region56: #{_lambda_.4} parent=50 // loop_footer
                  %s171 = sadd.s32 1, %s167
                $region57: #{_lambda_.4} parent=50 // loop_footer_branch
                  %166 = sbr.rel target = $region53
                $region58: #{_lambda_.4} parent=50 // loop_exit
                  _
              $region51: #{_lambda_.4} parent=35 // pred_fallthru
                _
              // Predicated region
              $region59: #{_lambda_.4} parent=35 // pred_check
                _
              $region60: #{_lambda_.4} parent=35 // pred_check_branch
                %187 = sbr.rel target = $region62
              $region61: #{_lambda_.4} parent=35 // pred_region
                _
              $region62: #{_lambda_.4} parent=35 // pred_fallthru
                _
            $region36: #{_lambda_.4} parent=31 // pred_fallthru
              _
            // Predicated region
            $region37: #{_lambda_.4} parent=31 // pred_check
              _
            $region38: #{_lambda_.4} parent=31 // pred_check_branch
              %142 = sbr.rel target = $region40
            $region39: #{_lambda_.4} parent=31 // pred_region
              loop: start=0, step=1, limit=1
              $region41: #{_lambda_.4} parent=39 // loop_pre_header
                _
              $region42: #{_lambda_.4} parent=39 // loop_header
                %s145 = sphi 0, %s149
                %p146 = scmp.ge.s32.totalorder %s145, 1
                %s150 = sphi %s136, %s136
                %s151 = sphi %s134, %s134
              $region43: #{_lambda_.4} parent=39 // loop_header_branch
                %148 = sbr.rel (%p146) target = $region47
              $region44: #{_lambda_.4} parent=39 // loop_body
                %v152 = vld [vmem:[%s150] sm:$0xff]
                %153 = vst [vmem:[%s151] sm:$0xff] %v152
                %v154 = vld [vmem:[%s150 + $0x10] sm:$0xff]
                %155 = vst [vmem:[%s151 + $0x8] sm:$0xff] %v154
                %v156 = vld [vmem:[%s150 + $0x20] sm:$0xff]
                %157 = vst [vmem:[%s151 + $0x10] sm:$0xff] %v156
                %v158 = vld [vmem:[%s150 + $0x30] sm:$0xff]
                %159 = vst [vmem:[%s151 + $0x18] sm:$0xff] %v158
                %v160 = vld [vmem:[%s150 + $0x40] sm:$0xff]
                %161 = vst [vmem:[%s151 + $0x20] sm:$0xff] %v160
                %v162 = vld [vmem:[%s150 + $0x50] sm:$0xff]
                %163 = vst [vmem:[%s151 + $0x28] sm:$0xff] %v162
              $region45: #{_lambda_.4} parent=39 // loop_footer
                %s149 = sadd.s32 1, %s145
              $region46: #{_lambda_.4} parent=39 // loop_footer_branch
                %144 = sbr.rel target = $region42
              $region47: #{_lambda_.4} parent=39 // loop_exit
                _
            $region40: #{_lambda_.4} parent=31 // pred_fallthru
              _
          $region32: #{_lambda_.4} parent=27 // pred_fallthru
            _
          %188 = vnop
        $region28: #{_lambda_.4} parent=23 // pred_fallthru
          _
      $region24: #{_lambda_.4} parent=5 // pred_fallthru
        _
      %p189 = scmp.le.s32.totalorder 1, %s9
      %p190 = scmp.lt.s32.totalorder %s9, 3
      %p191 = pnand %p189, %p190
      %p192 = pneg %p191
      // Predicated region
      $region63: #{_lambda_.4} parent=5 // pred_check
        _
      $region64: #{_lambda_.4} parent=5 // pred_check_branch
        %194 = sbr.rel (%p191) target = $region66
      $region65: #{_lambda_.4} parent=5 // pred_region
        %s195 = ssub.s32 %s9, 1
        %s196 = sand.u32 %s22, 1
        %s197 = sand.u32 %s22, 1
        %s198 = smul.addr %s197, 48
        %s199 = scalar_lea.vmem [#allocation2], %s198
        // Predicated region
        $region67: #{_lambda_.4} parent=65 // pred_check
          %p200 = pneg %p35
        $region68: #{_lambda_.4} parent=65 // pred_check_branch
          %202 = sbr.rel (%p200) target = $region70
        $region69: #{_lambda_.4} parent=65 // pred_region
          _
        $region70: #{_lambda_.4} parent=65 // pred_fallthru
          _
        %s203 = sand.u32 %s22, 1
        %s204 = sand.u32 %s22, 1
        %s205 = smul.addr %s204, 48
        %s206 = scalar_lea.vmem [#allocation2], %s205
        %p207 = pneg %p35
        %p208 = pneg %p32
        %p209 = pneg %p56
        %p210 = pneg %p53
        %p211 = pneg %p77
        %p212 = pneg %p74
        %p213 = pneg %p103
        %p214 = pneg %p100
        %s215 = sand.u32 %s90, 1
        %s216 = sand.u32 %s90, 1
        %s217 = smul.addr %s216, 16
        %s218 = scalar_lea.vmem [#allocation3], %s217
        %v219 = vld [vmem:[%s1] sm:$0x3f]
        %v220 = vld [vmem:[%s2] sm:$0x3f]
        %v221 = vld [vmem:[%s199] sm:$0xff]
        %v222 = vld [vmem:[%s199 + $0x8] sm:$0xff]
        %v223 = vld [vmem:[%s199 + $0x10] sm:$0xff]
        %225 = vset.pattern.permute.xlu0 0
        %226 = vperm.xlu0 %225, %v220
        %v227 = vpop.permute.xlu0 %226
        %vm229 = vcmask 195584
        %v231 = vsel %vm229, %v219, 0
        %233 = vmatprep.subr.mxu0 0.0
        %234 = vmatpush1.msra.mxu0 %v221
        %235 = vmatprep.subr.mxu0 0.0
        %236 = vmatpush1.msra.mxu0 %v222
        %237 = vmatprep.subr.mxu0 0.0
        %238 = vmatpush1.msra.mxu0 %v223
        %239 = vmatprep.subr.mxu0 0.0
        %240 = vmatpush1.msra.mxu0 0.0
        %241 = vmatprep.subr.mxu0 0.0
        %242 = vmatpush1.msra.mxu0 0.0
        %243 = vmatprep.subr.mxu0 0.0
        %244 = vmatpush1.msra.mxu0 0.0
        %245 = vmatprep.subr.mxu0 0.0
        %246 = vmatpush1.msra.mxu0 0.0
        %247 = vmatprep.subr.mxu0 0.0
        %248 = vmatpush1.msra.mxu0 0.0
        %249 = vmatprep.subr.mxu0 0.0
        %250 = vmatpush1.msra.mxu0 0.0
        %251 = vmatprep.subr.mxu0 0.0
        %252 = vmatpush1.msra.mxu0 0.0
        %253 = vmatprep.subr.mxu0 0.0
        %254 = vmatpush1.msra.mxu0 0.0
        %255 = vmatprep.subr.mxu0 0.0
        %256 = vmatpush1.msra.mxu0 0.0
        %257 = vmatprep.subr.mxu0 0.0
        %258 = vmatpush1.msra.mxu0 0.0
        %259 = vmatprep.subr.mxu0 0.0
        %260 = vmatpush1.msra.mxu0 0.0
        %261 = vmatprep.subr.mxu0 0.0
        %262 = vmatpush1.msra.mxu0 0.0
        %263 = vmatprep.subr.mxu0 0.0
        %264 = vmatpush1.msra.mxu0 0.0
        %265 = vmatprep.subr.mxu0 0.0
        %266 = vmatpush1.msra.mxu0 0.0
        %267 = vmatprep.subr.mxu0 0.0
        %268 = vmatpush1.msra.mxu0 0.0
        %269 = vmatprep.subr.mxu0 0.0
        %270 = vmatpush1.msra.mxu0 0.0
        %271 = vmatprep.subr.mxu0 0.0
        %272 = vmatpush1.msra.mxu0 0.0
        %273 = vmatprep.subr.mxu0 0.0
        %274 = vmatpush1.msra.mxu0 0.0
        %275 = vmatprep.subr.mxu0 0.0
        %276 = vmatpush1.msra.mxu0 0.0
        %277 = vmatprep.subr.mxu0 0.0
        %278 = vmatpush1.msra.mxu0 0.0
        %279 = vmatprep.subr.mxu0 0.0
        %280 = vmatpush1.msra.mxu0 0.0
        %281 = vmatprep.subr.mxu0 0.0
        %282 = vmatpush1.msra.mxu0 0.0
        %283 = vmatprep.subr.mxu0 0.0
        %284 = vmatpush1.msra.mxu0 0.0
        %285 = vmatprep.subr.mxu0 0.0
        %286 = vmatpush1.msra.mxu0 0.0
        %287 = vmatprep.subr.mxu0 0.0
        %288 = vmatpush1.msra.mxu0 0.0
        %289 = vmatprep.subr.mxu0 0.0
        %290 = vmatpush1.msra.mxu0 0.0
        %291 = vmatprep.subr.mxu0 0.0
        %292 = vmatpush1.msra.mxu0 0.0
        %293 = vmatprep.subr.mxu0 0.0
        %294 = vmatpush1.msra.mxu0 0.0
        %295 = vmatprep.subr.mxu0 0.0
        %296 = vmatpush1.msra.mxu0 0.0
        %297 = vmatprep.mubr.f32.mxu0 0.0
        %298 = vmatmul.mubr.f32.gmra.mrb[0].mxu0 %v231
        %v299 = vpop.f32.mrb[0].mxu0
        %v300 = vadd.f32 %v227, %v299
        %v301 = vpop.f32.mrb[0].mxu0
        %302 = vdwg.mxu0
        %303 = vst [vmem:[%s218] sm:$0x3f] %v300
        %s304 = scalar_lea.vmem %s199, 24 [#allocation2]
        %v305 = vld [vmem:[%s304] sm:$0xff]
        %v306 = vld [vmem:[%s304 + $0x8] sm:$0xff]
        %v307 = vld [vmem:[%s304 + $0x10] sm:$0xff]
        %308 = vmatprep.subr.mxu0 0.0
        %309 = vmatpush1.msra.mxu0 %v305
        %310 = vmatprep.subr.mxu0 0.0
        %311 = vmatpush1.msra.mxu0 %v306
        %312 = vmatprep.subr.mxu0 0.0
        %313 = vmatpush1.msra.mxu0 %v307
        %314 = vmatprep.subr.mxu0 0.0
        %315 = vmatpush1.msra.mxu0 0.0
        %316 = vmatprep.subr.mxu0 0.0
        %317 = vmatpush1.msra.mxu0 0.0
        %318 = vmatprep.subr.mxu0 0.0
        %319 = vmatpush1.msra.mxu0 0.0
        %320 = vmatprep.subr.mxu0 0.0
        %321 = vmatpush1.msra.mxu0 0.0
        %322 = vmatprep.subr.mxu0 0.0
        %323 = vmatpush1.msra.mxu0 0.0
        %324 = vmatprep.subr.mxu0 0.0
        %325 = vmatpush1.msra.mxu0 0.0
        %326 = vmatprep.subr.mxu0 0.0
        %327 = vmatpush1.msra.mxu0 0.0
        %328 = vmatprep.subr.mxu0 0.0
        %329 = vmatpush1.msra.mxu0 0.0
        %330 = vmatprep.subr.mxu0 0.0
        %331 = vmatpush1.msra.mxu0 0.0
        %332 = vmatprep.subr.mxu0 0.0
        %333 = vmatpush1.msra.mxu0 0.0
        %334 = vmatprep.subr.mxu0 0.0
        %335 = vmatpush1.msra.mxu0 0.0
        %336 = vmatprep.subr.mxu0 0.0
        %337 = vmatpush1.msra.mxu0 0.0
        %338 = vmatprep.subr.mxu0 0.0
        %339 = vmatpush1.msra.mxu0 0.0
        %340 = vmatprep.subr.mxu0 0.0
        %341 = vmatpush1.msra.mxu0 0.0
        %342 = vmatprep.subr.mxu0 0.0
        %343 = vmatpush1.msra.mxu0 0.0
        %344 = vmatprep.subr.mxu0 0.0
        %345 = vmatpush1.msra.mxu0 0.0
        %346 = vmatprep.subr.mxu0 0.0
        %347 = vmatpush1.msra.mxu0 0.0
        %348 = vmatprep.subr.mxu0 0.0
        %349 = vmatpush1.msra.mxu0 0.0
        %350 = vmatprep.subr.mxu0 0.0
        %351 = vmatpush1.msra.mxu0 0.0
        %352 = vmatprep.subr.mxu0 0.0
        %353 = vmatpush1.msra.mxu0 0.0
        %354 = vmatprep.subr.mxu0 0.0
        %355 = vmatpush1.msra.mxu0 0.0
        %356 = vmatprep.subr.mxu0 0.0
        %357 = vmatpush1.msra.mxu0 0.0
        %358 = vmatprep.subr.mxu0 0.0
        %359 = vmatpush1.msra.mxu0 0.0
        %360 = vmatprep.subr.mxu0 0.0
        %361 = vmatpush1.msra.mxu0 0.0
        %362 = vmatprep.subr.mxu0 0.0
        %363 = vmatpush1.msra.mxu0 0.0
        %364 = vmatprep.subr.mxu0 0.0
        %365 = vmatpush1.msra.mxu0 0.0
        %366 = vmatprep.subr.mxu0 0.0
        %367 = vmatpush1.msra.mxu0 0.0
        %368 = vmatprep.subr.mxu0 0.0
        %369 = vmatpush1.msra.mxu0 0.0
        %370 = vmatprep.subr.mxu0 0.0
        %371 = vmatpush1.msra.mxu0 0.0
        %372 = vmatprep.mubr.f32.mxu0 0.0
        %373 = vmatmul.mubr.f32.gmra.mrb[0].mxu0 %v231
        %v374 = vpop.f32.mrb[0].mxu0
        %v375 = vadd.f32 %v227, %v374
        %v376 = vpop.f32.mrb[0].mxu0
        %377 = vdwg.mxu0
        %s378 = scalar_lea.vmem %s218, 8 [#allocation3]
        %379 = vst [vmem:[%s378] sm:$0x3f] %v375
        %s380 = sand.u32 %s90, 1
        %s381 = sand.u32 %s90, 1
        %s382 = smul.addr %s381, 16
        %s383 = scalar_lea.vmem [#allocation3], %s382
        // Predicated region
        $region71: #{_lambda_.4} parent=65 // pred_check
          %p384 = pneg %p100
        $region72: #{_lambda_.4} parent=65 // pred_check_branch
          %386 = sbr.rel (%p384) target = $region74
        $region73: #{_lambda_.4} parent=65 // pred_region
          %s387 = smul.addr %s14, 8
          %s388 = scalar_lea.vmem %s3, %s387
          // Predicated region
          $region75: #{_lambda_.4} parent=73 // pred_check
            _
          $region76: #{_lambda_.4} parent=73 // pred_check_branch
            %390 = sbr.rel (0) target = $region78
          $region77: #{_lambda_.4} parent=73 // pred_region
            // Predicated region
            $region79: #{_lambda_.4} parent=77 // pred_check
              _
            $region80: #{_lambda_.4} parent=77 // pred_check_branch
              %392 = sbr.rel (0) target = $region82
            $region81: #{_lambda_.4} parent=77 // pred_region
              // Predicated region
              $region94: #{_lambda_.4} parent=81 // pred_check
                _
              $region95: #{_lambda_.4} parent=81 // pred_check_branch
                %409 = sbr.rel (0) target = $region97
              $region96: #{_lambda_.4} parent=81 // pred_region
                loop: start=0, step=1, limit=1
                $region98: #{_lambda_.4} parent=96 // loop_pre_header
                  _
                $region99: #{_lambda_.4} parent=96 // loop_header
                  %s411 = sphi 0, %s415
                  %p412 = scmp.ge.s32.totalorder %s411, 1
                  %s416 = sphi %s383, %s383
                  %s417 = sphi %s388, %s388
                $region100: #{_lambda_.4} parent=96 // loop_header_branch
                  %414 = sbr.rel (%p412) target = $region104
                $region101: #{_lambda_.4} parent=96 // loop_body
                  %v418 = vld [vmem:[%s416] sm:$0xff]
                  %419 = vst [vmem:[%s417] sm:$0xff] %v418
                  %v420 = vld [vmem:[%s416 + $0x8] sm:$0xff]
                  %421 = vst [vmem:[%s417 + $0x10] sm:$0xff] %v420
                $region102: #{_lambda_.4} parent=96 // loop_footer
                  %s415 = sadd.s32 1, %s411
                $region103: #{_lambda_.4} parent=96 // loop_footer_branch
                  %410 = sbr.rel target = $region99
                $region104: #{_lambda_.4} parent=96 // loop_exit
                  _
              $region97: #{_lambda_.4} parent=81 // pred_fallthru
                _
              // Predicated region
              $region105: #{_lambda_.4} parent=81 // pred_check
                _
              $region106: #{_lambda_.4} parent=81 // pred_check_branch
                %423 = sbr.rel target = $region108
              $region107: #{_lambda_.4} parent=81 // pred_region
                _
              $region108: #{_lambda_.4} parent=81 // pred_fallthru
                _
            $region82: #{_lambda_.4} parent=77 // pred_fallthru
              _
            // Predicated region
            $region83: #{_lambda_.4} parent=77 // pred_check
              _
            $region84: #{_lambda_.4} parent=77 // pred_check_branch
              %394 = sbr.rel target = $region86
            $region85: #{_lambda_.4} parent=77 // pred_region
              loop: start=0, step=1, limit=1
              $region87: #{_lambda_.4} parent=85 // loop_pre_header
                _
              $region88: #{_lambda_.4} parent=85 // loop_header
                %s397 = sphi 0, %s401
                %p398 = scmp.ge.s32.totalorder %s397, 1
                %s402 = sphi %s383, %s383
                %s403 = sphi %s388, %s388
              $region89: #{_lambda_.4} parent=85 // loop_header_branch
                %400 = sbr.rel (%p398) target = $region93
              $region90: #{_lambda_.4} parent=85 // loop_body
                %v404 = vld [vmem:[%s402] sm:$0xff]
                %405 = vst [vmem:[%s403] sm:$0xff] %v404
                %v406 = vld [vmem:[%s402 + $0x8] sm:$0xff]
                %407 = vst [vmem:[%s403 + $0x10] sm:$0xff] %v406
              $region91: #{_lambda_.4} parent=85 // loop_footer
                %s401 = sadd.s32 1, %s397
              $region92: #{_lambda_.4} parent=85 // loop_footer_branch
                %396 = sbr.rel target = $region88
              $region93: #{_lambda_.4} parent=85 // loop_exit
                _
            $region86: #{_lambda_.4} parent=77 // pred_fallthru
              _
          $region78: #{_lambda_.4} parent=73 // pred_fallthru
            _
          %424 = vnop
        $region74: #{_lambda_.4} parent=65 // pred_fallthru
          _
      $region66: #{_lambda_.4} parent=5 // pred_fallthru
        _
      %p425 = scmp.le.s32.totalorder 2, %s9
      // Predicated region
      $region109: #{_lambda_.4} parent=5 // pred_check
        %p426 = pneg %p425
      $region110: #{_lambda_.4} parent=5 // pred_check_branch
        %428 = sbr.rel (%p426) target = $region112
      $region111: #{_lambda_.4} parent=5 // pred_region
        %s429 = ssub.s32 %s9, 2
        // Predicated region
        $region113: #{_lambda_.4} parent=111 // pred_check
          %p430 = pneg %p106
        $region114: #{_lambda_.4} parent=111 // pred_check_branch
          %432 = sbr.rel (%p430) target = $region116
        $region115: #{_lambda_.4} parent=111 // pred_region
          %s433 = sand.u32 %s91, 1
          %s434 = sand.u32 %s91, 1
          %s435 = smul.addr %s434, 16
          %s436 = scalar_lea.vmem [#allocation3], %s435
        $region116: #{_lambda_.4} parent=111 // pred_fallthru
          _
      $region112: #{_lambda_.4} parent=5 // pred_fallthru
        _
    $region6: #{_lambda_.4} parent=1 // loop_footer
      %s13 = sadd.s32 1, %s9
    $region7: #{_lambda_.4} parent=1 // loop_footer_branch
      %8 = sbr.rel target = $region3
    $region8: #{_lambda_.4} parent=1 // loop_exit
      _

// kernel: _lambda_.5
$region0: #{_lambda_.5}
  #allocation0 [shape = 'u32[]', space=smem, size = 0x4, offset = 0x4, fixed_abs, tag = 'smem constant byte address 0x4 - core index']
  #allocation1 [shape = 'u32[144,128]{1,0:T(1,128)}', space=vmem, size = 0x12000, scoped, tag = 'internal scratch']
  %s0 = inlined_call_operand.vmem [shape: f32[2,12,4], index: 0, kind: input, shape index: {}]
  %s1 = inlined_call_operand.vmem [shape: f32[12,12], index: 1, kind: input, shape index: {}]
  %s2 = inlined_call_operand.vmem [shape: f32[12,1], index: 2, kind: input, shape index: {}]
  %s3 = inlined_call_operand.vmem [shape: f32[2,12,4], index: 3, kind: output, shape index: {}]
  %s4 = sld [smem:[#allocation0]]
  $region22: #{_lambda_.5} parent=0
    _
  %s6 = ssub.s32 1, %s4
  %s7 = scalar_select 0, %s6, %s4
  // Predicated region
  $region2: #{_lambda_.5} parent=0 // pred_check
    _
  $region3: #{_lambda_.5} parent=0 // pred_check_branch
    %9 = sbr.rel (0) target = $region5
  $region4: #{_lambda_.5} parent=0 // pred_region
    _
  $region5: #{_lambda_.5} parent=0 // pred_fallthru
    _
  // Predicated region
  $region6: #{_lambda_.5} parent=0 // pred_check
    _
  $region7: #{_lambda_.5} parent=0 // pred_check_branch
    %11 = sbr.rel (0) target = $region9
  $region8: #{_lambda_.5} parent=0 // pred_region
    _
  $region9: #{_lambda_.5} parent=0 // pred_fallthru
    _
  // Predicated region
  $region10: #{_lambda_.5} parent=0 // pred_check
    _
  $region11: #{_lambda_.5} parent=0 // pred_check_branch
    %13 = sbr.rel (0) target = $region13
  $region12: #{_lambda_.5} parent=0 // pred_region
    _
  $region13: #{_lambda_.5} parent=0 // pred_fallthru
    _
  %v14 = vld [vmem:[%s1] sm:$0xff]
  %v15 = vld [vmem:[%s1 + $0x8] sm:$0xf]
  %v16 = vld [vmem:[%s2] sm:$0xff]
  %v17 = vld [vmem:[%s2 + $0x8] sm:$0xf]
  %v18 = vld [vmem:[%s0] sm:$0xff]
  %v19 = vld [vmem:[%s0 + $0x8] sm:$0xf]
  %21 = vset.pattern.permute.xlu0 0
  %22 = vperm.xlu0 %21, %v16
  %v23 = vpop.permute.xlu0 %22
  %26 = vset.pattern.permute.xlu0 0
  %27 = vperm.xlu0 %26, %v17
  %v28 = vpop.permute.xlu0 %27
  %vm30 = vcmask 97280
  %v32 = vsel %vm30, %v14, 0
  %v35 = vsel %vm30, %v15, 0
  %vm37 = vcmask 1043456
  %v39 = vsel %vm37, %v19, 0
  %41 = vmatprep.subr.mxu0 0.0
  %42 = vmatpush1.msra.mxu0 %v18
  %43 = vmatprep.subr.mxu0 0.0
  %44 = vmatpush1.msra.mxu0 %v39
  %45 = vmatprep.subr.mxu0 0.0
  %46 = vmatpush1.msra.mxu0 0.0
  %47 = vmatprep.subr.mxu0 0.0
  %48 = vmatpush1.msra.mxu0 0.0
  %49 = vmatprep.subr.mxu0 0.0
  %50 = vmatpush1.msra.mxu0 0.0
  %51 = vmatprep.subr.mxu0 0.0
  %52 = vmatpush1.msra.mxu0 0.0
  %53 = vmatprep.subr.mxu0 0.0
  %54 = vmatpush1.msra.mxu0 0.0
  %55 = vmatprep.subr.mxu0 0.0
  %56 = vmatpush1.msra.mxu0 0.0
  %57 = vmatprep.subr.mxu0 0.0
  %58 = vmatpush1.msra.mxu0 0.0
  %59 = vmatprep.subr.mxu0 0.0
  %60 = vmatpush1.msra.mxu0 0.0
  %61 = vmatprep.subr.mxu0 0.0
  %62 = vmatpush1.msra.mxu0 0.0
  %63 = vmatprep.subr.mxu0 0.0
  %64 = vmatpush1.msra.mxu0 0.0
  %65 = vmatprep.subr.mxu0 0.0
  %66 = vmatpush1.msra.mxu0 0.0
  %67 = vmatprep.subr.mxu0 0.0
  %68 = vmatpush1.msra.mxu0 0.0
  %69 = vmatprep.subr.mxu0 0.0
  %70 = vmatpush1.msra.mxu0 0.0
  %71 = vmatprep.subr.mxu0 0.0
  %72 = vmatpush1.msra.mxu0 0.0
  %73 = vmatprep.subr.mxu0 0.0
  %74 = vmatpush1.msra.mxu0 0.0
  %75 = vmatprep.subr.mxu0 0.0
  %76 = vmatpush1.msra.mxu0 0.0
  %77 = vmatprep.subr.mxu0 0.0
  %78 = vmatpush1.msra.mxu0 0.0
  %79 = vmatprep.subr.mxu0 0.0
  %80 = vmatpush1.msra.mxu0 0.0
  %81 = vmatprep.subr.mxu0 0.0
  %82 = vmatpush1.msra.mxu0 0.0
  %83 = vmatprep.subr.mxu0 0.0
  %84 = vmatpush1.msra.mxu0 0.0
  %85 = vmatprep.subr.mxu0 0.0
  %86 = vmatpush1.msra.mxu0 0.0
  %87 = vmatprep.subr.mxu0 0.0
  %88 = vmatpush1.msra.mxu0 0.0
  %89 = vmatprep.subr.mxu0 0.0
  %90 = vmatpush1.msra.mxu0 0.0
  %91 = vmatprep.subr.mxu0 0.0
  %92 = vmatpush1.msra.mxu0 0.0
  %93 = vmatprep.subr.mxu0 0.0
  %94 = vmatpush1.msra.mxu0 0.0
  %95 = vmatprep.subr.mxu0 0.0
  %96 = vmatpush1.msra.mxu0 0.0
  %97 = vmatprep.subr.mxu0 0.0
  %98 = vmatpush1.msra.mxu0 0.0
  %99 = vmatprep.subr.mxu0 0.0
  %100 = vmatpush1.msra.mxu0 0.0
  %101 = vmatprep.subr.mxu0 0.0
  %102 = vmatpush1.msra.mxu0 0.0
  %103 = vmatprep.subr.mxu0 0.0
  %104 = vmatpush1.msra.mxu0 0.0
  %105 = vmatprep.mubr.f32.mxu0 0.0
  %106 = vmatmul.mubr.f32.gmra.mrb[0].mxu0 %v32
  %v107 = vpop.f32.mrb[0].mxu0
  %v108 = vadd.f32 %v23, %v107
  %v109 = vpop.f32.mrb[0].mxu0
  %110 = vmatprep.mubr.f32.mxu0 0.0
  %111 = vmatmul.mubr.f32.gmra.mrb[0].mxu0 %v35
  %v112 = vpop.f32.mrb[0].mxu0
  %v113 = vadd.f32 %v28, %v112
  %v114 = vpop.f32.mrb[0].mxu0
  %115 = vdwg.mxu0
  %vm116 = vcmask 31744
  %117 = vst.msk [vmem:[%s3] sm:$0xff] %vm116, %v108
  %vm118 = vcmask 27648
  %119 = vst.msk [vmem:[%s3 + $0x8] sm:$0xf] %vm118, %v113
  %s120 = scalar_lea.vmem %s0, 16
  %v121 = vld [vmem:[%s120] sm:$0xff]
  %v122 = vld [vmem:[%s120 + $0x8] sm:$0xf]
  %v124 = vsel %vm37, %v122, 0
  %126 = vmatprep.subr.mxu0 0.0
  %127 = vmatpush1.msra.mxu0 %v121
  %128 = vmatprep.subr.mxu0 0.0
  %129 = vmatpush1.msra.mxu0 %v124
  %130 = vmatprep.subr.mxu0 0.0
  %131 = vmatpush1.msra.mxu0 0.0
  %132 = vmatprep.subr.mxu0 0.0
  %133 = vmatpush1.msra.mxu0 0.0
  %134 = vmatprep.subr.mxu0 0.0
  %135 = vmatpush1.msra.mxu0 0.0
  %136 = vmatprep.subr.mxu0 0.0
  %137 = vmatpush1.msra.mxu0 0.0
  %138 = vmatprep.subr.mxu0 0.0
  %139 = vmatpush1.msra.mxu0 0.0
  %140 = vmatprep.subr.mxu0 0.0
  %141 = vmatpush1.msra.mxu0 0.0
  %142 = vmatprep.subr.mxu0 0.0
  %143 = vmatpush1.msra.mxu0 0.0
  %144 = vmatprep.subr.mxu0 0.0
  %145 = vmatpush1.msra.mxu0 0.0
  %146 = vmatprep.subr.mxu0 0.0
  %147 = vmatpush1.msra.mxu0 0.0
  %148 = vmatprep.subr.mxu0 0.0
  %149 = vmatpush1.msra.mxu0 0.0
  %150 = vmatprep.subr.mxu0 0.0
  %151 = vmatpush1.msra.mxu0 0.0
  %152 = vmatprep.subr.mxu0 0.0
  %153 = vmatpush1.msra.mxu0 0.0
  %154 = vmatprep.subr.mxu0 0.0
  %155 = vmatpush1.msra.mxu0 0.0
  %156 = vmatprep.subr.mxu0 0.0
  %157 = vmatpush1.msra.mxu0 0.0
  %158 = vmatprep.subr.mxu0 0.0
  %159 = vmatpush1.msra.mxu0 0.0
  %160 = vmatprep.subr.mxu0 0.0
  %161 = vmatpush1.msra.mxu0 0.0
  %162 = vmatprep.subr.mxu0 0.0
  %163 = vmatpush1.msra.mxu0 0.0
  %164 = vmatprep.subr.mxu0 0.0
  %165 = vmatpush1.msra.mxu0 0.0
  %166 = vmatprep.subr.mxu0 0.0
  %167 = vmatpush1.msra.mxu0 0.0
  %168 = vmatprep.subr.mxu0 0.0
  %169 = vmatpush1.msra.mxu0 0.0
  %170 = vmatprep.subr.mxu0 0.0
  %171 = vmatpush1.msra.mxu0 0.0
  %172 = vmatprep.subr.mxu0 0.0
  %173 = vmatpush1.msra.mxu0 0.0
  %174 = vmatprep.subr.mxu0 0.0
  %175 = vmatpush1.msra.mxu0 0.0
  %176 = vmatprep.subr.mxu0 0.0
  %177 = vmatpush1.msra.mxu0 0.0
  %178 = vmatprep.subr.mxu0 0.0
  %179 = vmatpush1.msra.mxu0 0.0
  %180 = vmatprep.subr.mxu0 0.0
  %181 = vmatpush1.msra.mxu0 0.0
  %182 = vmatprep.subr.mxu0 0.0
  %183 = vmatpush1.msra.mxu0 0.0
  %184 = vmatprep.subr.mxu0 0.0
  %185 = vmatpush1.msra.mxu0 0.0
  %186 = vmatprep.subr.mxu0 0.0
  %187 = vmatpush1.msra.mxu0 0.0
  %188 = vmatprep.subr.mxu0 0.0
  %189 = vmatpush1.msra.mxu0 0.0
  %190 = vmatprep.mubr.f32.mxu0 0.0
  %191 = vmatmul.mubr.f32.gmra.mrb[0].mxu0 %v32
  %v192 = vpop.f32.mrb[0].mxu0
  %v193 = vadd.f32 %v23, %v192
  %v194 = vpop.f32.mrb[0].mxu0
  %195 = vmatprep.mubr.f32.mxu0 0.0
  %196 = vmatmul.mubr.f32.gmra.mrb[0].mxu0 %v35
  %v197 = vpop.f32.mrb[0].mxu0
  %v198 = vadd.f32 %v28, %v197
  %v199 = vpop.f32.mrb[0].mxu0
  %200 = vdwg.mxu0
  %s201 = scalar_lea.vmem %s3, 16
  %202 = vst.msk [vmem:[%s201] sm:$0xff] %vm116, %v193
  %203 = vst.msk [vmem:[%s201 + $0x8] sm:$0xf] %vm118, %v198
  // Predicated region
  $region14: #{_lambda_.5} parent=0 // pred_check
    _
  $region15: #{_lambda_.5} parent=0 // pred_check_branch
    %205 = sbr.rel (0) target = $region17
  $region16: #{_lambda_.5} parent=0 // pred_region
    _
  $region17: #{_lambda_.5} parent=0 // pred_fallthru
    _
  // Predicated region
  $region18: #{_lambda_.5} parent=0 // pred_check
    _
  $region19: #{_lambda_.5} parent=0 // pred_check_branch
    %207 = sbr.rel (0) target = $region21
  $region20: #{_lambda_.5} parent=0 // pred_region
    _
  $region21: #{_lambda_.5} parent=0 // pred_fallthru
    _

// kernel: _lambda_.7
$region0: #{_lambda_.7}
  #allocation0 [shape = 'u32[]', space=smem, size = 0x4, offset = 0x4, fixed_abs, tag = 'smem constant byte address 0x4 - core index']
  #allocation1 [shape = 'u32[144,128]{1,0:T(1,128)}', space=vmem, size = 0x12000, scoped, tag = 'internal scratch']
  %s0 = inlined_call_operand.vmem [shape: f32[2,24,256], index: 0, kind: input, shape index: {}]
  %s1 = inlined_call_operand.vmem [shape: f32[2,6,256], index: 1, kind: input, shape index: {}]
  %s2 = inlined_call_operand.vmem [shape: f32[2,6,4], index: 2, kind: input, shape index: {}]
  %s3 = inlined_call_operand.vmem [shape: f32[4,256], index: 3, kind: input, shape index: {}]
  %s4 = inlined_call_operand.vmem [shape: f32[6,6], index: 4, kind: input, shape index: {}]
  %s5 = inlined_call_operand.vmem [shape: f32[6,1], index: 5, kind: input, shape index: {}]
  %s6 = inlined_call_operand.vmem [shape: f32[24,6], index: 6, kind: input, shape index: {}]
  %s7 = inlined_call_operand.vmem [shape: f32[24,1], index: 7, kind: input, shape index: {}]
  %s8 = inlined_call_operand.vmem [shape: f32[2,24,256], index: 8, kind: output, shape index: {}]
  %s9 = sld [smem:[#allocation0]]
  $region175: #{_lambda_.7} parent=0
    _
  %s11 = ssub.s32 1, %s9
  %s12 = scalar_select 0, %s11, %s9
  $region1: #{_lambda_.7} parent=0
    #allocation2 [shape = 'u8[49152]{0}', space=vmem, size = 0xc000, scoped, tag = 'input window, operand 0']
    #allocation3 [shape = 'u8[16384]{0}', space=vmem, size = 0x4000, scoped, tag = 'input window, operand 1']
    #allocation4 [shape = 'u8[49152]{0}', space=vmem, size = 0xc000, scoped, tag = 'output window, operand 0']
    loop: start=0, step=1, limit=4
    $region2: #{_lambda_.7} parent=1 // loop_pre_header
      _
    $region3: #{_lambda_.7} parent=1 // loop_header
      %s14 = sphi 0, %s18
      %p15 = scmp.ge.s32.totalorder %s14, 4
      %s24 = sphi 0, %s26
      %s27 = sphi 0, %s24
      %s28 = sphi 0, %s27
      %s44 = sphi 0, %s28
      %s50 = sphi 0, %s52
      %s53 = sphi 0, %s50
      %s54 = sphi 0, %s53
      %s70 = sphi 0, %s54
      %s74 = sphi 0, %s74
      %s76 = sphi 0, %s74
      %s77 = sphi 0, %s76
      %s91 = sphi 0, %s77
      %s97 = sphi 0, %s99
      %s100 = sphi 0, %s97
      %s101 = sphi 0, %s100
      %s117 = sphi 0, %s101
      %s121 = sphi 0, %s121
      %s123 = sphi 0, %s121
      %s124 = sphi 0, %s123
      %s138 = sphi 0, %s124
      %s142 = sphi 0, %s142
      %s144 = sphi 0, %s142
      %s145 = sphi 0, %s144
      %s159 = sphi 0, %s145
      %s163 = sphi 0, %s163
      %s165 = sphi 0, %s163
      %s166 = sphi 0, %s165
      %s180 = sphi 0, %s166
      %s184 = sphi 0, %s184
      %s186 = sphi 0, %s184
      %s187 = sphi 0, %s186
      %s201 = sphi 0, %s187
      %s207 = sphi 0, %s209
      %s210 = sphi 0, %s207
      %s211 = sphi 0, %s210
      %s227 = sphi 0, %s211
    $region4: #{_lambda_.7} parent=1 // loop_header_branch
      %17 = sbr.rel (%p15) target = $region8
    $region5: #{_lambda_.7} parent=1 // loop_body
      %s19 = ssub.s32 %s14, 1
      %s20 = ssub.s32 %s14, 2
      %s21 = sadd.s32 %s14, 1
      %s22 = ssub.s32 %s14, %s21
      %p23 = scmp.eq.s32.totalorder %s22, 0
      %s25 = sadd.s32 %s24, 1
      %s26 = scalar_select %p23, %s24, %s25
      %p29 = pneg %p23
      %p30 = scmp.eq.s32.totalorder %s14, 1
      %p31 = por %p29, %p30
      %p32 = scmp.ne.s32.totalorder %s24, %s27
      %p33 = scmp.eq.s32.totalorder %s14, 0
      %p34 = por %p32, %p33
      %p35 = scmp.ne.s32.totalorder %s24, %s27
      %p36 = scmp.eq.s32.totalorder %s19, 1
      %p37 = por %p35, %p36
      %p38 = scmp.ne.s32.totalorder %s27, %s28
      %p39 = scmp.eq.s32.totalorder %s19, 0
      %p40 = por %p38, %p39
      %p41 = scmp.ne.s32.totalorder %s27, %s28
      %p42 = scmp.eq.s32.totalorder %s20, 1
      %p43 = por %p41, %p42
      %p45 = scmp.ne.s32.totalorder %s28, %s44
      %p46 = scmp.eq.s32.totalorder %s20, 0
      %p47 = por %p45, %p46
      %s48 = ssub.s32 %s14, %s21
      %p49 = scmp.eq.s32.totalorder %s48, 0
      %s51 = sadd.s32 %s50, 1
      %s52 = scalar_select %p49, %s50, %s51
      %p55 = pneg %p49
      %p56 = scmp.eq.s32.totalorder %s14, 1
      %p57 = por %p55, %p56
      %p58 = scmp.ne.s32.totalorder %s50, %s53
      %p59 = scmp.eq.s32.totalorder %s14, 0
      %p60 = por %p58, %p59
      %p61 = scmp.ne.s32.totalorder %s50, %s53
      %p62 = scmp.eq.s32.totalorder %s19, 1
      %p63 = por %p61, %p62
      %p64 = scmp.ne.s32.totalorder %s53, %s54
      %p65 = scmp.eq.s32.totalorder %s19, 0
      %p66 = por %p64, %p65
      %p67 = scmp.ne.s32.totalorder %s53, %s54
      %p68 = scmp.eq.s32.totalorder %s20, 1
      %p69 = por %p67, %p68
      %p71 = scmp.ne.s32.totalorder %s54, %s70
      %p72 = scmp.eq.s32.totalorder %s20, 0
      %p73 = por %p71, %p72
      %s75 = sadd.s32 %s74, 1
      %p78 = scmp.eq.s32.totalorder %s14, 1
      %p79 = scmp.ne.s32.totalorder %s74, %s76
      %p80 = scmp.eq.s32.totalorder %s14, 0
      %p81 = por %p79, %p80
      %p82 = scmp.ne.s32.totalorder %s74, %s76
      %p83 = scmp.eq.s32.totalorder %s19, 1
      %p84 = por %p82, %p83
      %p85 = scmp.ne.s32.totalorder %s76, %s77
      %p86 = scmp.eq.s32.totalorder %s19, 0
      %p87 = por %p85, %p86
      %p88 = scmp.ne.s32.totalorder %s76, %s77
      %p89 = scmp.eq.s32.totalorder %s20, 1
      %p90 = por %p88, %p89
      %p92 = scmp.ne.s32.totalorder %s77, %s91
      %p93 = scmp.eq.s32.totalorder %s20, 0
      %p94 = por %p92, %p93
      %s95 = ssub.s32 %s14, %s21
      %p96 = scmp.eq.s32.totalorder %s95, 0
      %s98 = sadd.s32 %s97, 1
      %s99 = scalar_select %p96, %s97, %s98
      %p102 = pneg %p96
      %p103 = scmp.eq.s32.totalorder %s14, 1
      %p104 = por %p102, %p103
      %p105 = scmp.ne.s32.totalorder %s97, %s100
      %p106 = scmp.eq.s32.totalorder %s14, 0
      %p107 = por %p105, %p106
      %p108 = scmp.ne.s32.totalorder %s97, %s100
      %p109 = scmp.eq.s32.totalorder %s19, 1
      %p110 = por %p108, %p109
      %p111 = scmp.ne.s32.totalorder %s100, %s101
      %p112 = scmp.eq.s32.totalorder %s19, 0
      %p113 = por %p111, %p112
      %p114 = scmp.ne.s32.totalorder %s100, %s101
      %p115 = scmp.eq.s32.totalorder %s20, 1
      %p116 = por %p114, %p115
      %p118 = scmp.ne.s32.totalorder %s101, %s117
      %p119 = scmp.eq.s32.totalorder %s20, 0
      %p120 = por %p118, %p119
      %s122 = sadd.s32 %s121, 1
      %p125 = scmp.eq.s32.totalorder %s14, 1
      %p126 = scmp.ne.s32.totalorder %s121, %s123
      %p127 = scmp.eq.s32.totalorder %s14, 0
      %p128 = por %p126, %p127
      %p129 = scmp.ne.s32.totalorder %s121, %s123
      %p130 = scmp.eq.s32.totalorder %s19, 1
      %p131 = por %p129, %p130
      %p132 = scmp.ne.s32.totalorder %s123, %s124
      %p133 = scmp.eq.s32.totalorder %s19, 0
      %p134 = por %p132, %p133
      %p135 = scmp.ne.s32.totalorder %s123, %s124
      %p136 = scmp.eq.s32.totalorder %s20, 1
      %p137 = por %p135, %p136
      %p139 = scmp.ne.s32.totalorder %s124, %s138
      %p140 = scmp.eq.s32.totalorder %s20, 0
      %p141 = por %p139, %p140
      %s143 = sadd.s32 %s142, 1
      %p146 = scmp.eq.s32.totalorder %s14, 1
      %p147 = scmp.ne.s32.totalorder %s142, %s144
      %p148 = scmp.eq.s32.totalorder %s14, 0
      %p149 = por %p147, %p148
      %p150 = scmp.ne.s32.totalorder %s142, %s144
      %p151 = scmp.eq.s32.totalorder %s19, 1
      %p152 = por %p150, %p151
      %p153 = scmp.ne.s32.totalorder %s144, %s145
      %p154 = scmp.eq.s32.totalorder %s19, 0
      %p155 = por %p153, %p154
      %p156 = scmp.ne.s32.totalorder %s144, %s145
      %p157 = scmp.eq.s32.totalorder %s20, 1
      %p158 = por %p156, %p157
      %p160 = scmp.ne.s32.totalorder %s145, %s159
      %p161 = scmp.eq.s32.totalorder %s20, 0
      %p162 = por %p160, %p161
      %s164 = sadd.s32 %s163, 1
      %p167 = scmp.eq.s32.totalorder %s14, 1
      %p168 = scmp.ne.s32.totalorder %s163, %s165
      %p169 = scmp.eq.s32.totalorder %s14, 0
      %p170 = por %p168, %p169
      %p171 = scmp.ne.s32.totalorder %s163, %s165
      %p172 = scmp.eq.s32.totalorder %s19, 1
      %p173 = por %p171, %p172
      %p174 = scmp.ne.s32.totalorder %s165, %s166
      %p175 = scmp.eq.s32.totalorder %s19, 0
      %p176 = por %p174, %p175
      %p177 = scmp.ne.s32.totalorder %s165, %s166
      %p178 = scmp.eq.s32.totalorder %s20, 1
      %p179 = por %p177, %p178
      %p181 = scmp.ne.s32.totalorder %s166, %s180
      %p182 = scmp.eq.s32.totalorder %s20, 0
      %p183 = por %p181, %p182
      %s185 = sadd.s32 %s184, 1
      %p188 = scmp.eq.s32.totalorder %s14, 1
      %p189 = scmp.ne.s32.totalorder %s184, %s186
      %p190 = scmp.eq.s32.totalorder %s14, 0
      %p191 = por %p189, %p190
      %p192 = scmp.ne.s32.totalorder %s184, %s186
      %p193 = scmp.eq.s32.totalorder %s19, 1
      %p194 = por %p192, %p193
      %p195 = scmp.ne.s32.totalorder %s186, %s187
      %p196 = scmp.eq.s32.totalorder %s19, 0
      %p197 = por %p195, %p196
      %p198 = scmp.ne.s32.totalorder %s186, %s187
      %p199 = scmp.eq.s32.totalorder %s20, 1
      %p200 = por %p198, %p199
      %p202 = scmp.ne.s32.totalorder %s187, %s201
      %p203 = scmp.eq.s32.totalorder %s20, 0
      %p204 = por %p202, %p203
      %s205 = ssub.s32 %s14, %s21
      %p206 = scmp.eq.s32.totalorder %s205, 0
      %s208 = sadd.s32 %s207, 1
      %s209 = scalar_select %p206, %s207, %s208
      %p212 = pneg %p206
      %p213 = scmp.eq.s32.totalorder %s14, 1
      %p214 = por %p212, %p213
      %p215 = scmp.ne.s32.totalorder %s207, %s210
      %p216 = scmp.eq.s32.totalorder %s14, 0
      %p217 = por %p215, %p216
      %p218 = scmp.ne.s32.totalorder %s207, %s210
      %p219 = scmp.eq.s32.totalorder %s19, 1
      %p220 = por %p218, %p219
      %p221 = scmp.ne.s32.totalorder %s210, %s211
      %p222 = scmp.eq.s32.totalorder %s19, 0
      %p223 = por %p221, %p222
      %p224 = scmp.ne.s32.totalorder %s210, %s211
      %p225 = scmp.eq.s32.totalorder %s20, 1
      %p226 = por %p224, %p225
      %p228 = scmp.ne.s32.totalorder %s211, %s227
      %p229 = scmp.eq.s32.totalorder %s20, 0
      %p230 = por %p228, %p229
      %p231 = scmp.le.s32.totalorder 1, %s14
      %p232 = scmp.lt.s32.totalorder %s14, 3
      %p233 = pnand %p231, %p232
      %p234 = pneg %p233
      // Predicated region
      $region9: #{_lambda_.7} parent=5 // pred_check
        _
      $region10: #{_lambda_.7} parent=5 // pred_check_branch
        %236 = sbr.rel (%p233) target = $region12
      $region11: #{_lambda_.7} parent=5 // pred_region
        %s237 = ssub.s32 %s14, 1
        // Predicated region
        $region13: #{_lambda_.7} parent=11 // pred_check
          %p238 = pneg %p87
        $region14: #{_lambda_.7} parent=11 // pred_check_branch
          %240 = sbr.rel (%p238) target = $region16
        $region15: #{_lambda_.7} parent=11 // pred_region
          _
        $region16: #{_lambda_.7} parent=11 // pred_fallthru
          _
        // Predicated region
        $region17: #{_lambda_.7} parent=11 // pred_check
          %p241 = pneg %p134
        $region18: #{_lambda_.7} parent=11 // pred_check_branch
          %243 = sbr.rel (%p241) target = $region20
        $region19: #{_lambda_.7} parent=11 // pred_region
          _
        $region20: #{_lambda_.7} parent=11 // pred_fallthru
          _
        // Predicated region
        $region21: #{_lambda_.7} parent=11 // pred_check
          %p244 = pneg %p155
        $region22: #{_lambda_.7} parent=11 // pred_check_branch
          %246 = sbr.rel (%p244) target = $region24
        $region23: #{_lambda_.7} parent=11 // pred_region
          _
        $region24: #{_lambda_.7} parent=11 // pred_fallthru
          _
        // Predicated region
        $region25: #{_lambda_.7} parent=11 // pred_check
          %p247 = pneg %p176
        $region26: #{_lambda_.7} parent=11 // pred_check_branch
          %249 = sbr.rel (%p247) target = $region28
        $region27: #{_lambda_.7} parent=11 // pred_region
          _
        $region28: #{_lambda_.7} parent=11 // pred_fallthru
          _
        // Predicated region
        $region29: #{_lambda_.7} parent=11 // pred_check
          %p250 = pneg %p197
        $region30: #{_lambda_.7} parent=11 // pred_check_branch
          %252 = sbr.rel (%p250) target = $region32
        $region31: #{_lambda_.7} parent=11 // pred_region
          _
        $region32: #{_lambda_.7} parent=11 // pred_fallthru
          _
      $region12: #{_lambda_.7} parent=5 // pred_fallthru
        _
      %p253 = scmp.lt.s32.totalorder %s14, 2
      // Predicated region
      $region33: #{_lambda_.7} parent=5 // pred_check
        %p254 = pneg %p253
      $region34: #{_lambda_.7} parent=5 // pred_check_branch
        %256 = sbr.rel (%p254) target = $region36
      $region35: #{_lambda_.7} parent=5 // pred_region
        // Predicated region
        $region37: #{_lambda_.7} parent=35 // pred_check
          %p257 = pneg %p34
        $region38: #{_lambda_.7} parent=35 // pred_check_branch
          %259 = sbr.rel (%p257) target = $region40
        $region39: #{_lambda_.7} parent=35 // pred_region
          %s260 = sand.u32 %s24, 1
          %s261 = sand.u32 %s24, 1
          %s262 = smul.addr %s261, 48
          %s263 = scalar_lea.vmem [#allocation2], %s262
          %s264 = smul.addr %s14, 8
          %s265 = scalar_lea.vmem %s0, %s264
          // Predicated region
          $region41: #{_lambda_.7} parent=39 // pred_check
            _
          $region42: #{_lambda_.7} parent=39 // pred_check_branch
            %267 = sbr.rel (0) target = $region44
          $region43: #{_lambda_.7} parent=39 // pred_region
            // Predicated region
            $region45: #{_lambda_.7} parent=43 // pred_check
              _
            $region46: #{_lambda_.7} parent=43 // pred_check_branch
              %269 = sbr.rel (0) target = $region48
            $region47: #{_lambda_.7} parent=43 // pred_region
              // Predicated region
              $region60: #{_lambda_.7} parent=47 // pred_check
                _
              $region61: #{_lambda_.7} parent=47 // pred_check_branch
                %294 = sbr.rel (0) target = $region63
              $region62: #{_lambda_.7} parent=47 // pred_region
                loop: start=0, step=1, limit=1
                $region64: #{_lambda_.7} parent=62 // loop_pre_header
                  _
                $region65: #{_lambda_.7} parent=62 // loop_header
                  %s296 = sphi 0, %s300
                  %p297 = scmp.ge.s32.totalorder %s296, 1
                  %s301 = sphi %s265, %s265
                  %s302 = sphi %s263, %s263
                $region66: #{_lambda_.7} parent=62 // loop_header_branch
                  %299 = sbr.rel (%p297) target = $region70
                $region67: #{_lambda_.7} parent=62 // loop_body
                  %v303 = vld [vmem:[%s301] sm:$0xff]
                  %304 = vst [vmem:[%s302] sm:$0xff] %v303
                  %v305 = vld [vmem:[%s301 + $0x10] sm:$0xff]
                  %306 = vst [vmem:[%s302 + $0x8] sm:$0xff] %v305
                  %v307 = vld [vmem:[%s301 + $0x20] sm:$0xff]
                  %308 = vst [vmem:[%s302 + $0x10] sm:$0xff] %v307
                  %v309 = vld [vmem:[%s301 + $0x30] sm:$0xff]
                  %310 = vst [vmem:[%s302 + $0x18] sm:$0xff] %v309
                  %v311 = vld [vmem:[%s301 + $0x40] sm:$0xff]
                  %312 = vst [vmem:[%s302 + $0x20] sm:$0xff] %v311
                  %v313 = vld [vmem:[%s301 + $0x50] sm:$0xff]
                  %314 = vst [vmem:[%s302 + $0x28] sm:$0xff] %v313
                $region68: #{_lambda_.7} parent=62 // loop_footer
                  %s300 = sadd.s32 1, %s296
                $region69: #{_lambda_.7} parent=62 // loop_footer_branch
                  %295 = sbr.rel target = $region65
                $region70: #{_lambda_.7} parent=62 // loop_exit
                  _
              $region63: #{_lambda_.7} parent=47 // pred_fallthru
                _
              // Predicated region
              $region71: #{_lambda_.7} parent=47 // pred_check
                _
              $region72: #{_lambda_.7} parent=47 // pred_check_branch
                %316 = sbr.rel target = $region74
              $region73: #{_lambda_.7} parent=47 // pred_region
                _
              $region74: #{_lambda_.7} parent=47 // pred_fallthru
                _
            $region48: #{_lambda_.7} parent=43 // pred_fallthru
              _
            // Predicated region
            $region49: #{_lambda_.7} parent=43 // pred_check
              _
            $region50: #{_lambda_.7} parent=43 // pred_check_branch
              %271 = sbr.rel target = $region52
            $region51: #{_lambda_.7} parent=43 // pred_region
              loop: start=0, step=1, limit=1
              $region53: #{_lambda_.7} parent=51 // loop_pre_header
                _
              $region54: #{_lambda_.7} parent=51 // loop_header
                %s274 = sphi 0, %s278
                %p275 = scmp.ge.s32.totalorder %s274, 1
                %s279 = sphi %s265, %s265
                %s280 = sphi %s263, %s263
              $region55: #{_lambda_.7} parent=51 // loop_header_branch
                %277 = sbr.rel (%p275) target = $region59
              $region56: #{_lambda_.7} parent=51 // loop_body
                %v281 = vld [vmem:[%s279] sm:$0xff]
                %282 = vst [vmem:[%s280] sm:$0xff] %v281
                %v283 = vld [vmem:[%s279 + $0x10] sm:$0xff]
                %284 = vst [vmem:[%s280 + $0x8] sm:$0xff] %v283
                %v285 = vld [vmem:[%s279 + $0x20] sm:$0xff]
                %286 = vst [vmem:[%s280 + $0x10] sm:$0xff] %v285
                %v287 = vld [vmem:[%s279 + $0x30] sm:$0xff]
                %288 = vst [vmem:[%s280 + $0x18] sm:$0xff] %v287
                %v289 = vld [vmem:[%s279 + $0x40] sm:$0xff]
                %290 = vst [vmem:[%s280 + $0x20] sm:$0xff] %v289
                %v291 = vld [vmem:[%s279 + $0x50] sm:$0xff]
                %292 = vst [vmem:[%s280 + $0x28] sm:$0xff] %v291
              $region57: #{_lambda_.7} parent=51 // loop_footer
                %s278 = sadd.s32 1, %s274
              $region58: #{_lambda_.7} parent=51 // loop_footer_branch
                %273 = sbr.rel target = $region54
              $region59: #{_lambda_.7} parent=51 // loop_exit
                _
            $region52: #{_lambda_.7} parent=43 // pred_fallthru
              _
          $region44: #{_lambda_.7} parent=39 // pred_fallthru
            _
          %317 = vnop
        $region40: #{_lambda_.7} parent=35 // pred_fallthru
          _
        // Predicated region
        $region75: #{_lambda_.7} parent=35 // pred_check
          %p318 = pneg %p60
        $region76: #{_lambda_.7} parent=35 // pred_check_branch
          %320 = sbr.rel (%p318) target = $region78
        $region77: #{_lambda_.7} parent=35 // pred_region
          %s321 = sand.u32 %s50, 1
          %s322 = sand.u32 %s50, 1
          %s323 = smul.addr %s322, 16
          %s324 = scalar_lea.vmem [#allocation3], %s323
          %s325 = smul.addr %s14, 8
          %s326 = scalar_lea.vmem %s1, %s325
          // Predicated region
          $region79: #{_lambda_.7} parent=77 // pred_check
            _
          $region80: #{_lambda_.7} parent=77 // pred_check_branch
            %328 = sbr.rel (0) target = $region82
          $region81: #{_lambda_.7} parent=77 // pred_region
            // Predicated region
            $region83: #{_lambda_.7} parent=81 // pred_check
              _
            $region84: #{_lambda_.7} parent=81 // pred_check_branch
              %330 = sbr.rel (0) target = $region86
            $region85: #{_lambda_.7} parent=81 // pred_region
              // Predicated region
              $region98: #{_lambda_.7} parent=85 // pred_check
                _
              $region99: #{_lambda_.7} parent=85 // pred_check_branch
                %347 = sbr.rel (0) target = $region101
              $region100: #{_lambda_.7} parent=85 // pred_region
                loop: start=0, step=1, limit=1
                $region102: #{_lambda_.7} parent=100 // loop_pre_header
                  _
                $region103: #{_lambda_.7} parent=100 // loop_header
                  %s349 = sphi 0, %s353
                  %p350 = scmp.ge.s32.totalorder %s349, 1
                  %s354 = sphi %s326, %s326
                  %s355 = sphi %s324, %s324
                $region104: #{_lambda_.7} parent=100 // loop_header_branch
                  %352 = sbr.rel (%p350) target = $region108
                $region105: #{_lambda_.7} parent=100 // loop_body
                  %v356 = vld [vmem:[%s354] sm:$0xff]
                  %357 = vst [vmem:[%s355] sm:$0xff] %v356
                  %v358 = vld [vmem:[%s354 + $0x10] sm:$0xff]
                  %359 = vst [vmem:[%s355 + $0x8] sm:$0xff] %v358
                $region106: #{_lambda_.7} parent=100 // loop_footer
                  %s353 = sadd.s32 1, %s349
                $region107: #{_lambda_.7} parent=100 // loop_footer_branch
                  %348 = sbr.rel target = $region103
                $region108: #{_lambda_.7} parent=100 // loop_exit
                  _
              $region101: #{_lambda_.7} parent=85 // pred_fallthru
                _
              // Predicated region
              $region109: #{_lambda_.7} parent=85 // pred_check
                _
              $region110: #{_lambda_.7} parent=85 // pred_check_branch
                %361 = sbr.rel target = $region112
              $region111: #{_lambda_.7} parent=85 // pred_region
                _
              $region112: #{_lambda_.7} parent=85 // pred_fallthru
                _
            $region86: #{_lambda_.7} parent=81 // pred_fallthru
              _
            // Predicated region
            $region87: #{_lambda_.7} parent=81 // pred_check
              _
            $region88: #{_lambda_.7} parent=81 // pred_check_branch
              %332 = sbr.rel target = $region90
            $region89: #{_lambda_.7} parent=81 // pred_region
              loop: start=0, step=1, limit=1
              $region91: #{_lambda_.7} parent=89 // loop_pre_header
                _
              $region92: #{_lambda_.7} parent=89 // loop_header
                %s335 = sphi 0, %s339
                %p336 = scmp.ge.s32.totalorder %s335, 1
                %s340 = sphi %s326, %s326
                %s341 = sphi %s324, %s324
              $region93: #{_lambda_.7} parent=89 // loop_header_branch
                %338 = sbr.rel (%p336) target = $region97
              $region94: #{_lambda_.7} parent=89 // loop_body
                %v342 = vld [vmem:[%s340] sm:$0xff]
                %343 = vst [vmem:[%s341] sm:$0xff] %v342
                %v344 = vld [vmem:[%s340 + $0x10] sm:$0xff]
                %345 = vst [vmem:[%s341 + $0x8] sm:$0xff] %v344
              $region95: #{_lambda_.7} parent=89 // loop_footer
                %s339 = sadd.s32 1, %s335
              $region96: #{_lambda_.7} parent=89 // loop_footer_branch
                %334 = sbr.rel target = $region92
              $region97: #{_lambda_.7} parent=89 // loop_exit
                _
            $region90: #{_lambda_.7} parent=81 // pred_fallthru
              _
          $region82: #{_lambda_.7} parent=77 // pred_fallthru
            _
          %362 = vnop
        $region78: #{_lambda_.7} parent=35 // pred_fallthru
          _
        // Predicated region
        $region113: #{_lambda_.7} parent=35 // pred_check
          %p363 = pneg %p107
        $region114: #{_lambda_.7} parent=35 // pred_check_branch
          %365 = sbr.rel (%p363) target = $region116
        $region115: #{_lambda_.7} parent=35 // pred_region
          %p366 = scmp.lt.s32.totalorder %s14, 1
          %s367 = scalar_select %p366, %s14, 1
          %s368 = smul.addr %s367, 4
          %s369 = scalar_lea.vmem %s3, %s368
        $region116: #{_lambda_.7} parent=35 // pred_fallthru
          _
      $region36: #{_lambda_.7} parent=5 // pred_fallthru
        _
      %p370 = scmp.le.s32.totalorder 1, %s14
      %p371 = scmp.lt.s32.totalorder %s14, 3
      %p372 = pnand %p370, %p371
      %p373 = pneg %p372
      // Predicated region
      $region117: #{_lambda_.7} parent=5 // pred_check
        _
      $region118: #{_lambda_.7} parent=5 // pred_check_branch
        %375 = sbr.rel (%p372) target = $region120
      $region119: #{_lambda_.7} parent=5 // pred_region
        %s376 = ssub.s32 %s14, 1
        %s377 = sand.u32 %s27, 1
        %s378 = sand.u32 %s27, 1
        %s379 = smul.addr %s378, 48
        %s380 = scalar_lea.vmem [#allocation2], %s379
        // Predicated region
        $region121: #{_lambda_.7} parent=119 // pred_check
          %p381 = pneg %p40
        $region122: #{_lambda_.7} parent=119 // pred_check_branch
          %383 = sbr.rel (%p381) target = $region124
        $region123: #{_lambda_.7} parent=119 // pred_region
          _
        $region124: #{_lambda_.7} parent=119 // pred_fallthru
          _
        %s384 = sand.u32 %s53, 1
        %s385 = sand.u32 %s53, 1
        %s386 = smul.addr %s385, 16
        %s387 = scalar_lea.vmem [#allocation3], %s386
        // Predicated region
        $region125: #{_lambda_.7} parent=119 // pred_check
          %p388 = pneg %p66
        $region126: #{_lambda_.7} parent=119 // pred_check_branch
          %390 = sbr.rel (%p388) target = $region128
        $region127: #{_lambda_.7} parent=119 // pred_region
          _
        $region128: #{_lambda_.7} parent=119 // pred_fallthru
          _
        %s391 = sand.u32 %s27, 1
        %s392 = sand.u32 %s27, 1
        %s393 = smul.addr %s392, 48
        %s394 = scalar_lea.vmem [#allocation2], %s393
        %p395 = pneg %p40
        %p396 = pneg %p37
        %s397 = sand.u32 %s53, 1
        %s398 = sand.u32 %s53, 1
        %s399 = smul.addr %s398, 16
        %s400 = scalar_lea.vmem [#allocation3], %s399
        %p401 = pneg %p66
        %p402 = pneg %p63
        %p403 = pneg %p87
        %p404 = pneg %p84
        %p405 = scmp.lt.s32.totalorder %s19, 1
        %s406 = scalar_select %p405, %s19, 1
        %s407 = smul.addr %s406, 4
        %s408 = scalar_lea.vmem %s3, %s407
        %p409 = pneg %p113
        %p410 = pneg %p110
        %p411 = pneg %p134
        %p412 = pneg %p131
        %p413 = pneg %p155
        %p414 = pneg %p152
        %p415 = pneg %p176
        %p416 = pneg %p173
        %p417 = pneg %p197
        %p418 = pneg %p194
        %p419 = pneg %p223
        %p420 = pneg %p220
        %s421 = sand.u32 %s210, 1
        %s422 = sand.u32 %s210, 1
        %s423 = smul.addr %s422, 48
        %s424 = scalar_lea.vmem [#allocation4], %s423
        %p425 = scmp.lt.s32.totalorder %s19, 1
        %s426 = scalar_select %p425, %s19, 1
        %s427 = smul.addr %s426, 4
        %s428 = scalar_lea.vmem %s3, %s427
        %v429 = vld [vmem:[%s428] sm:$0xf]
        %v430 = vld [vmem:[%s4] sm:$0x3f]
        %v431 = vld [vmem:[%s5] sm:$0x3f]
        %v432 = vld [vmem:[%s6] sm:$0xff]
        %v433 = vld [vmem:[%s6 + $0x8] sm:$0xff]
        %v434 = vld [vmem:[%s6 + $0x10] sm:$0xff]
        %v435 = vld [vmem:[%s7] sm:$0xff]
        %v436 = vld [vmem:[%s7 + $0x8] sm:$0xff]
        %v437 = vld [vmem:[%s7 + $0x10] sm:$0xff]
        %v438 = vld [vmem:[%s387] sm:$0x3f]
        %v439 = vld [vmem:[%s2] sm:$0x3f]
        %441 = vset.pattern.permute.xlu0 0
        %442 = vperm.xlu0 %441, %v431
        %v443 = vpop.permute.xlu0 %442
        %vm445 = vcmask 48128
        %v447 = vsel %vm445, %v430, 0
        %vm449 = vcmask 1045504
        %v451 = vsel %vm449, %v438, 0
        %453 = vmatprep.subr.mxu0 0.0
        %454 = vmatpush1.msra.mxu0 %v451
        %455 = vmatprep.subr.mxu0 0.0
        %456 = vmatpush1.msra.mxu0 0.0
        %457 = vmatprep.subr.mxu0 0.0
        %458 = vmatpush1.msra.mxu0 0.0
        %459 = vmatprep.subr.mxu0 0.0
        %460 = vmatpush1.msra.mxu0 0.0
        %461 = vmatprep.subr.mxu0 0.0
        %462 = vmatpush1.msra.mxu0 0.0
        %463 = vmatprep.subr.mxu0 0.0
        %464 = vmatpush1.msra.mxu0 0.0
        %465 = vmatprep.subr.mxu0 0.0
        %466 = vmatpush1.msra.mxu0 0.0
        %467 = vmatprep.subr.mxu0 0.0
        %468 = vmatpush1.msra.mxu0 0.0
        %469 = vmatprep.subr.mxu0 0.0
        %470 = vmatpush1.msra.mxu0 0.0
        %471 = vmatprep.subr.mxu0 0.0
        %472 = vmatpush1.msra.mxu0 0.0
        %473 = vmatprep.subr.mxu0 0.0
        %474 = vmatpush1.msra.mxu0 0.0
        %475 = vmatprep.subr.mxu0 0.0
        %476 = vmatpush1.msra.mxu0 0.0
        %477 = vmatprep.subr.mxu0 0.0
        %478 = vmatpush1.msra.mxu0 0.0
        %479 = vmatprep.subr.mxu0 0.0
        %480 = vmatpush1.msra.mxu0 0.0
        %481 = vmatprep.subr.mxu0 0.0
        %482 = vmatpush1.msra.mxu0 0.0
        %483 = vmatprep.subr.mxu0 0.0
        %484 = vmatpush1.msra.mxu0 0.0
        %485 = vmatprep.subr.mxu0 0.0
        %486 = vmatpush1.msra.mxu0 0.0
        %487 = vmatprep.subr.mxu0 0.0
        %488 = vmatpush1.msra.mxu0 0.0
        %489 = vmatprep.subr.mxu0 0.0
        %490 = vmatpush1.msra.mxu0 0.0
        %491 = vmatprep.subr.mxu0 0.0
        %492 = vmatpush1.msra.mxu0 0.0
        %493 = vmatprep.subr.mxu0 0.0
        %494 = vmatpush1.msra.mxu0 0.0
        %495 = vmatprep.subr.mxu0 0.0
        %496 = vmatpush1.msra.mxu0 0.0
        %497 = vmatprep.subr.mxu0 0.0
        %498 = vmatpush1.msra.mxu0 0.0
        %499 = vmatprep.subr.mxu0 0.0
        %500 = vmatpush1.msra.mxu0 0.0
        %501 = vmatprep.subr.mxu0 0.0
        %502 = vmatpush1.msra.mxu0 0.0
        %503 = vmatprep.subr.mxu0 0.0
        %504 = vmatpush1.msra.mxu0 0.0
        %505 = vmatprep.subr.mxu0 0.0
        %506 = vmatpush1.msra.mxu0 0.0
        %507 = vmatprep.subr.mxu0 0.0
        %508 = vmatpush1.msra.mxu0 0.0
        %509 = vmatprep.subr.mxu0 0.0
        %510 = vmatpush1.msra.mxu0 0.0
        %511 = vmatprep.subr.mxu0 0.0
        %512 = vmatpush1.msra.mxu0 0.0
        %513 = vmatprep.subr.mxu0 0.0
        %514 = vmatpush1.msra.mxu0 0.0
        %515 = vmatprep.subr.mxu0 0.0
        %516 = vmatpush1.msra.mxu0 0.0
        %517 = vmatprep.mubr.f32.mxu0 0.0
        %518 = vmatmul.mubr.f32.gmra.mrb[0].mxu0 %v447
        %v519 = vpop.f32.mrb[0].mxu0
        %v520 = vadd.f32 %v443, %v519
        %v521 = vpop.f32.mrb[0].mxu0
        %522 = vdwg.mxu0
        %vm523 = vcmask 31744
        %v525 = vsel %vm523, %v439, 0
        %vm527 = vcmask 1043456
        %v529 = vsel %vm527, %v429, 0
        %531 = vmatprep.subr.mxu0 0.0
        %532 = vmatpush1.msra.mxu0 %v529
        %533 = vmatprep.subr.mxu0 0.0
        %534 = vmatpush1.msra.mxu0 0.0
        %535 = vmatprep.subr.mxu0 0.0
        %536 = vmatpush1.msra.mxu0 0.0
        %537 = vmatprep.subr.mxu0 0.0
        %538 = vmatpush1.msra.mxu0 0.0
        %539 = vmatprep.subr.mxu0 0.0
        %540 = vmatpush1.msra.mxu0 0.0
        %541 = vmatprep.subr.mxu0 0.0
        %542 = vmatpush1.msra.mxu0 0.0
        %543 = vmatprep.subr.mxu0 0.0
        %544 = vmatpush1.msra.mxu0 0.0
        %545 = vmatprep.subr.mxu0 0.0
        %546 = vmatpush1.msra.mxu0 0.0
        %547 = vmatprep.subr.mxu0 0.0
        %548 = vmatpush1.msra.mxu0 0.0
        %549 = vmatprep.subr.mxu0 0.0
        %550 = vmatpush1.msra.mxu0 0.0
        %551 = vmatprep.subr.mxu0 0.0
        %552 = vmatpush1.msra.mxu0 0.0
        %553 = vmatprep.subr.mxu0 0.0
        %554 = vmatpush1.msra.mxu0 0.0
        %555 = vmatprep.subr.mxu0 0.0
        %556 = vmatpush1.msra.mxu0 0.0
        %557 = vmatprep.subr.mxu0 0.0
        %558 = vmatpush1.msra.mxu0 0.0
        %559 = vmatprep.subr.mxu0 0.0
        %560 = vmatpush1.msra.mxu0 0.0
        %561 = vmatprep.subr.mxu0 0.0
        %562 = vmatpush1.msra.mxu0 0.0
        %563 = vmatprep.subr.mxu0 0.0
        %564 = vmatpush1.msra.mxu0 0.0
        %565 = vmatprep.subr.mxu0 0.0
        %566 = vmatpush1.msra.mxu0 0.0
        %567 = vmatprep.subr.mxu0 0.0
        %568 = vmatpush1.msra.mxu0 0.0
        %569 = vmatprep.subr.mxu0 0.0
        %570 = vmatpush1.msra.mxu0 0.0
        %571 = vmatprep.subr.mxu0 0.0
        %572 = vmatpush1.msra.mxu0 0.0
        %573 = vmatprep.subr.mxu0 0.0
        %574 = vmatpush1.msra.mxu0 0.0
        %575 = vmatprep.subr.mxu0 0.0
        %576 = vmatpush1.msra.mxu0 0.0
        %577 = vmatprep.subr.mxu0 0.0
        %578 = vmatpush1.msra.mxu0 0.0
        %579 = vmatprep.subr.mxu0 0.0
        %580 = vmatpush1.msra.mxu0 0.0
        %581 = vmatprep.subr.mxu0 0.0
        %582 = vmatpush1.msra.mxu0 0.0
        %583 = vmatprep.subr.mxu0 0.0
        %584 = vmatpush1.msra.mxu0 0.0
        %585 = vmatprep.subr.mxu0 0.0
        %586 = vmatpush1.msra.mxu0 0.0
        %587 = vmatprep.subr.mxu0 0.0
        %588 = vmatpush1.msra.mxu0 0.0
        %589 = vmatprep.subr.mxu0 0.0
        %590 = vmatpush1.msra.mxu0 0.0
        %591 = vmatprep.subr.mxu0 0.0
        %592 = vmatpush1.msra.mxu0 0.0
        %593 = vmatprep.subr.mxu0 0.0
        %594 = vmatpush1.msra.mxu0 0.0
        %595 = vmatprep.mubr.f32.mxu0 0.0
        %596 = vmatmul.mubr.f32.gmra.mrb[0].mxu0 %v525
        %v597 = vpop.f32.mrb[0].mxu0
        %v598 = vadd.f32 %v520, %v597
        %v599 = vpop.f32.mrb[0].mxu0
        %600 = vdwg.mxu0
        %602 = vset.pattern.permute.xlu0 0
        %603 = vperm.xlu0 %602, %v435
        %v604 = vpop.permute.xlu0 %603
        %607 = vset.pattern.permute.xlu0 0
        %608 = vperm.xlu0 %607, %v436
        %v609 = vpop.permute.xlu0 %608
        %612 = vset.pattern.permute.xlu0 0
        %613 = vperm.xlu0 %612, %v437
        %v614 = vpop.permute.xlu0 %613
        %v617 = vsel %vm445, %v432, 0
        %v620 = vsel %vm445, %v433, 0
        %v623 = vsel %vm445, %v434, 0
        %v626 = vsel %vm449, %v598, 0
        %628 = vmatprep.subr.mxu0 0.0
        %629 = vmatpush1.msra.mxu0 %v626
        %630 = vmatprep.subr.mxu0 0.0
        %631 = vmatpush1.msra.mxu0 0.0
        %632 = vmatprep.subr.mxu0 0.0
        %633 = vmatpush1.msra.mxu0 0.0
        %634 = vmatprep.subr.mxu0 0.0
        %635 = vmatpush1.msra.mxu0 0.0
        %636 = vmatprep.subr.mxu0 0.0
        %637 = vmatpush1.msra.mxu0 0.0
        %638 = vmatprep.subr.mxu0 0.0
        %639 = vmatpush1.msra.mxu0 0.0
        %640 = vmatprep.subr.mxu0 0.0
        %641 = vmatpush1.msra.mxu0 0.0
        %642 = vmatprep.subr.mxu0 0.0
        %643 = vmatpush1.msra.mxu0 0.0
        %644 = vmatprep.subr.mxu0 0.0
        %645 = vmatpush1.msra.mxu0 0.0
        %646 = vmatprep.subr.mxu0 0.0
        %647 = vmatpush1.msra.mxu0 0.0
        %648 = vmatprep.subr.mxu0 0.0
        %649 = vmatpush1.msra.mxu0 0.0
        %650 = vmatprep.subr.mxu0 0.0
        %651 = vmatpush1.msra.mxu0 0.0
        %652 = vmatprep.subr.mxu0 0.0
        %653 = vmatpush1.msra.mxu0 0.0
        %654 = vmatprep.subr.mxu0 0.0
        %655 = vmatpush1.msra.mxu0 0.0
        %656 = vmatprep.subr.mxu0 0.0
        %657 = vmatpush1.msra.mxu0 0.0
        %658 = vmatprep.subr.mxu0 0.0
        %659 = vmatpush1.msra.mxu0 0.0
        %660 = vmatprep.subr.mxu0 0.0
        %661 = vmatpush1.msra.mxu0 0.0
        %662 = vmatprep.subr.mxu0 0.0
        %663 = vmatpush1.msra.mxu0 0.0
        %664 = vmatprep.subr.mxu0 0.0
        %665 = vmatpush1.msra.mxu0 0.0
        %666 = vmatprep.subr.mxu0 0.0
        %667 = vmatpush1.msra.mxu0 0.0
        %668 = vmatprep.subr.mxu0 0.0
        %669 = vmatpush1.msra.mxu0 0.0
        %670 = vmatprep.subr.mxu0 0.0
        %671 = vmatpush1.msra.mxu0 0.0
        %672 = vmatprep.subr.mxu0 0.0
        %673 = vmatpush1.msra.mxu0 0.0
        %674 = vmatprep.subr.mxu0 0.0
        %675 = vmatpush1.msra.mxu0 0.0
        %676 = vmatprep.subr.mxu0 0.0
        %677 = vmatpush1.msra.mxu0 0.0
        %678 = vmatprep.subr.mxu0 0.0
        %679 = vmatpush1.msra.mxu0 0.0
        %680 = vmatprep.subr.mxu0 0.0
        %681 = vmatpush1.msra.mxu0 0.0
        %682 = vmatprep.subr.mxu0 0.0
        %683 = vmatpush1.msra.mxu0 0.0
        %684 = vmatprep.subr.mxu0 0.0
        %685 = vmatpush1.msra.mxu0 0.0
        %686 = vmatprep.subr.mxu0 0.0
        %687 = vmatpush1.msra.mxu0 0.0
        %688 = vmatprep.subr.mxu0 0.0
        %689 = vmatpush1.msra.mxu0 0.0
        %690 = vmatprep.subr.mxu0 0.0
        %691 = vmatpush1.msra.mxu0 0.0
        %692 = vmatprep.mubr.f32.mxu0 0.0
        %693 = vmatmul.mubr.f32.gmra.mrb[0].mxu0 %v617
        %v694 = vpop.f32.mrb[0].mxu0
        %v695 = vadd.f32 %v604, %v694
        %v696 = vpop.f32.mrb[0].mxu0
        %697 = vmatprep.mubr.f32.mxu0 0.0
        %698 = vmatmul.mubr.f32.gmra.mrb[0].mxu0 %v620
        %v699 = vpop.f32.mrb[0].mxu0
        %v700 = vadd.f32 %v609, %v699
        %v701 = vpop.f32.mrb[0].mxu0
        %702 = vmatprep.mubr.f32.mxu0 0.0
        %703 = vmatmul.mubr.f32.gmra.mrb[0].mxu0 %v623
        %v704 = vpop.f32.mrb[0].mxu0
        %v705 = vadd.f32 %v614, %v704
        %v706 = vpop.f32.mrb[0].mxu0
        %707 = vdwg.mxu0
        %v708 = vxor.u32 %v695, 2147483648
        %v709 = vxor.u32 %v700, 2147483648
        %v710 = vxor.u32 %v705, 2147483648
        %v711 = vmul.f32 %v708, 1.442695
        %v712 = vpow.pop %v711
        %v713 = vmul.f32 %v709, 1.442695
        %v714 = vpow.pop %v713
        %v715 = vmul.f32 %v710, 1.442695
        %v716 = vpow.pop %v715
        %v717 = vadd.f32 %v712, 1.0
        %v718 = vadd.f32 %v714, 1.0
        %v719 = vadd.f32 %v716, 1.0
        %v720 = vrcp.pop %v717
        %v721 = vmul.f32 1.0, %v720
        %v722 = vrcp.pop %v718
        %v723 = vmul.f32 1.0, %v722
        %v724 = vrcp.pop %v719
        %v725 = vmul.f32 1.0, %v724
        %v726 = vld [vmem:[%s380] sm:$0xff]
        %v727 = vld [vmem:[%s380 + $0x8] sm:$0xff]
        %v728 = vld [vmem:[%s380 + $0x10] sm:$0xff]
        %v729 = vmul.f32 %v726, %v721
        %v730 = vmul.f32 %v727, %v723
        %v731 = vmul.f32 %v728, %v725
        %732 = vst [vmem:[%s424] sm:$0xff] %v729
        %733 = vst [vmem:[%s424 + $0x8] sm:$0xff] %v730
        %734 = vst [vmem:[%s424 + $0x10] sm:$0xff] %v731
        %s735 = scalar_lea.vmem %s387, 8 [#allocation3]
        %v736 = vld [vmem:[%s735] sm:$0x3f]
        %s737 = scalar_lea.vmem %s2, 8
        %v738 = vld [vmem:[%s737] sm:$0x3f]
        %v740 = vsel %vm449, %v736, 0
        %742 = vmatprep.subr.mxu0 0.0
        %743 = vmatpush1.msra.mxu0 %v740
        %744 = vmatprep.subr.mxu0 0.0
        %745 = vmatpush1.msra.mxu0 0.0
        %746 = vmatprep.subr.mxu0 0.0
        %747 = vmatpush1.msra.mxu0 0.0
        %748 = vmatprep.subr.mxu0 0.0
        %749 = vmatpush1.msra.mxu0 0.0
        %750 = vmatprep.subr.mxu0 0.0
        %751 = vmatpush1.msra.mxu0 0.0
        %752 = vmatprep.subr.mxu0 0.0
        %753 = vmatpush1.msra.mxu0 0.0
        %754 = vmatprep.subr.mxu0 0.0
        %755 = vmatpush1.msra.mxu0 0.0
        %756 = vmatprep.subr.mxu0 0.0
        %757 = vmatpush1.msra.mxu0 0.0
        %758 = vmatprep.subr.mxu0 0.0
        %759 = vmatpush1.msra.mxu0 0.0
        %760 = vmatprep.subr.mxu0 0.0
        %761 = vmatpush1.msra.mxu0 0.0
        %762 = vmatprep.subr.mxu0 0.0
        %763 = vmatpush1.msra.mxu0 0.0
        %764 = vmatprep.subr.mxu0 0.0
        %765 = vmatpush1.msra.mxu0 0.0
        %766 = vmatprep.subr.mxu0 0.0
        %767 = vmatpush1.msra.mxu0 0.0
        %768 = vmatprep.subr.mxu0 0.0
        %769 = vmatpush1.msra.mxu0 0.0
        %770 = vmatprep.subr.mxu0 0.0
        %771 = vmatpush1.msra.mxu0 0.0
        %772 = vmatprep.subr.mxu0 0.0
        %773 = vmatpush1.msra.mxu0 0.0
        %774 = vmatprep.subr.mxu0 0.0
        %775 = vmatpush1.msra.mxu0 0.0
        %776 = vmatprep.subr.mxu0 0.0
        %777 = vmatpush1.msra.mxu0 0.0
        %778 = vmatprep.subr.mxu0 0.0
        %779 = vmatpush1.msra.mxu0 0.0
        %780 = vmatprep.subr.mxu0 0.0
        %781 = vmatpush1.msra.mxu0 0.0
        %782 = vmatprep.subr.mxu0 0.0
        %783 = vmatpush1.msra.mxu0 0.0
        %784 = vmatprep.subr.mxu0 0.0
        %785 = vmatpush1.msra.mxu0 0.0
        %786 = vmatprep.subr.mxu0 0.0
        %787 = vmatpush1.msra.mxu0 0.0
        %788 = vmatprep.subr.mxu0 0.0
        %789 = vmatpush1.msra.mxu0 0.0
        %790 = vmatprep.subr.mxu0 0.0
        %791 = vmatpush1.msra.mxu0 0.0
        %792 = vmatprep.subr.mxu0 0.0
        %793 = vmatpush1.msra.mxu0 0.0
        %794 = vmatprep.subr.mxu0 0.0
        %795 = vmatpush1.msra.mxu0 0.0
        %796 = vmatprep.subr.mxu0 0.0
        %797 = vmatpush1.msra.mxu0 0.0
        %798 = vmatprep.subr.mxu0 0.0
        %799 = vmatpush1.msra.mxu0 0.0
        %800 = vmatprep.subr.mxu0 0.0
        %801 = vmatpush1.msra.mxu0 0.0
        %802 = vmatprep.subr.mxu0 0.0
        %803 = vmatpush1.msra.mxu0 0.0
        %804 = vmatprep.subr.mxu0 0.0
        %805 = vmatpush1.msra.mxu0 0.0
        %806 = vmatprep.mubr.f32.mxu0 0.0
        %807 = vmatmul.mubr.f32.gmra.mrb[0].mxu0 %v447
        %v808 = vpop.f32.mrb[0].mxu0
        %v809 = vadd.f32 %v443, %v808
        %v810 = vpop.f32.mrb[0].mxu0
        %811 = vdwg.mxu0
        %v813 = vsel %vm523, %v738, 0
        %815 = vmatprep.subr.mxu0 0.0
        %816 = vmatpush1.msra.mxu0 %v529
        %817 = vmatprep.subr.mxu0 0.0
        %818 = vmatpush1.msra.mxu0 0.0
        %819 = vmatprep.subr.mxu0 0.0
        %820 = vmatpush1.msra.mxu0 0.0
        %821 = vmatprep.subr.mxu0 0.0
        %822 = vmatpush1.msra.mxu0 0.0
        %823 = vmatprep.subr.mxu0 0.0
        %824 = vmatpush1.msra.mxu0 0.0
        %825 = vmatprep.subr.mxu0 0.0
        %826 = vmatpush1.msra.mxu0 0.0
        %827 = vmatprep.subr.mxu0 0.0
        %828 = vmatpush1.msra.mxu0 0.0
        %829 = vmatprep.subr.mxu0 0.0
        %830 = vmatpush1.msra.mxu0 0.0
        %831 = vmatprep.subr.mxu0 0.0
        %832 = vmatpush1.msra.mxu0 0.0
        %833 = vmatprep.subr.mxu0 0.0
        %834 = vmatpush1.msra.mxu0 0.0
        %835 = vmatprep.subr.mxu0 0.0
        %836 = vmatpush1.msra.mxu0 0.0
        %837 = vmatprep.subr.mxu0 0.0
        %838 = vmatpush1.msra.mxu0 0.0
        %839 = vmatprep.subr.mxu0 0.0
        %840 = vmatpush1.msra.mxu0 0.0
        %841 = vmatprep.subr.mxu0 0.0
        %842 = vmatpush1.msra.mxu0 0.0
        %843 = vmatprep.subr.mxu0 0.0
        %844 = vmatpush1.msra.mxu0 0.0
        %845 = vmatprep.subr.mxu0 0.0
        %846 = vmatpush1.msra.mxu0 0.0
        %847 = vmatprep.subr.mxu0 0.0
        %848 = vmatpush1.msra.mxu0 0.0
        %849 = vmatprep.subr.mxu0 0.0
        %850 = vmatpush1.msra.mxu0 0.0
        %851 = vmatprep.subr.mxu0 0.0
        %852 = vmatpush1.msra.mxu0 0.0
        %853 = vmatprep.subr.mxu0 0.0
        %854 = vmatpush1.msra.mxu0 0.0
        %855 = vmatprep.subr.mxu0 0.0
        %856 = vmatpush1.msra.mxu0 0.0
        %857 = vmatprep.subr.mxu0 0.0
        %858 = vmatpush1.msra.mxu0 0.0
        %859 = vmatprep.subr.mxu0 0.0
        %860 = vmatpush1.msra.mxu0 0.0
        %861 = vmatprep.subr.mxu0 0.0
        %862 = vmatpush1.msra.mxu0 0.0
        %863 = vmatprep.subr.mxu0 0.0
        %864 = vmatpush1.msra.mxu0 0.0
        %865 = vmatprep.subr.mxu0 0.0
        %866 = vmatpush1.msra.mxu0 0.0
        %867 = vmatprep.subr.mxu0 0.0
        %868 = vmatpush1.msra.mxu0 0.0
        %869 = vmatprep.subr.mxu0 0.0
        %870 = vmatpush1.msra.mxu0 0.0
        %871 = vmatprep.subr.mxu0 0.0
        %872 = vmatpush1.msra.mxu0 0.0
        %873 = vmatprep.subr.mxu0 0.0
        %874 = vmatpush1.msra.mxu0 0.0
        %875 = vmatprep.subr.mxu0 0.0
        %876 = vmatpush1.msra.mxu0 0.0
        %877 = vmatprep.subr.mxu0 0.0
        %878 = vmatpush1.msra.mxu0 0.0
        %879 = vmatprep.mubr.f32.mxu0 0.0
        %880 = vmatmul.mubr.f32.gmra.mrb[0].mxu0 %v813
        %v881 = vpop.f32.mrb[0].mxu0
        %v882 = vadd.f32 %v809, %v881
        %v883 = vpop.f32.mrb[0].mxu0
        %884 = vdwg.mxu0
        %v886 = vsel %vm449, %v882, 0
        %888 = vmatprep.subr.mxu0 0.0
        %889 = vmatpush1.msra.mxu0 %v886
        %890 = vmatprep.subr.mxu0 0.0
        %891 = vmatpush1.msra.mxu0 0.0
        %892 = vmatprep.subr.mxu0 0.0
        %893 = vmatpush1.msra.mxu0 0.0
        %894 = vmatprep.subr.mxu0 0.0
        %895 = vmatpush1.msra.mxu0 0.0
        %896 = vmatprep.subr.mxu0 0.0
        %897 = vmatpush1.msra.mxu0 0.0
        %898 = vmatprep.subr.mxu0 0.0
        %899 = vmatpush1.msra.mxu0 0.0
        %900 = vmatprep.subr.mxu0 0.0
        %901 = vmatpush1.msra.mxu0 0.0
        %902 = vmatprep.subr.mxu0 0.0
        %903 = vmatpush1.msra.mxu0 0.0
        %904 = vmatprep.subr.mxu0 0.0
        %905 = vmatpush1.msra.mxu0 0.0
        %906 = vmatprep.subr.mxu0 0.0
        %907 = vmatpush1.msra.mxu0 0.0
        %908 = vmatprep.subr.mxu0 0.0
        %909 = vmatpush1.msra.mxu0 0.0
        %910 = vmatprep.subr.mxu0 0.0
        %911 = vmatpush1.msra.mxu0 0.0
        %912 = vmatprep.subr.mxu0 0.0
        %913 = vmatpush1.msra.mxu0 0.0
        %914 = vmatprep.subr.mxu0 0.0
        %915 = vmatpush1.msra.mxu0 0.0
        %916 = vmatprep.subr.mxu0 0.0
        %917 = vmatpush1.msra.mxu0 0.0
        %918 = vmatprep.subr.mxu0 0.0
        %919 = vmatpush1.msra.mxu0 0.0
        %920 = vmatprep.subr.mxu0 0.0
        %921 = vmatpush1.msra.mxu0 0.0
        %922 = vmatprep.subr.mxu0 0.0
        %923 = vmatpush1.msra.mxu0 0.0
        %924 = vmatprep.subr.mxu0 0.0
        %925 = vmatpush1.msra.mxu0 0.0
        %926 = vmatprep.subr.mxu0 0.0
        %927 = vmatpush1.msra.mxu0 0.0
        %928 = vmatprep.subr.mxu0 0.0
        %929 = vmatpush1.msra.mxu0 0.0
        %930 = vmatprep.subr.mxu0 0.0
        %931 = vmatpush1.msra.mxu0 0.0
        %932 = vmatprep.subr.mxu0 0.0
        %933 = vmatpush1.msra.mxu0 0.0
        %934 = vmatprep.subr.mxu0 0.0
        %935 = vmatpush1.msra.mxu0 0.0
        %936 = vmatprep.subr.mxu0 0.0
        %937 = vmatpush1.msra.mxu0 0.0
        %938 = vmatprep.subr.mxu0 0.0
        %939 = vmatpush1.msra.mxu0 0.0
        %940 = vmatprep.subr.mxu0 0.0
        %941 = vmatpush1.msra.mxu0 0.0
        %942 = vmatprep.subr.mxu0 0.0
        %943 = vmatpush1.msra.mxu0 0.0
        %944 = vmatprep.subr.mxu0 0.0
        %945 = vmatpush1.msra.mxu0 0.0
        %946 = vmatprep.subr.mxu0 0.0
        %947 = vmatpush1.msra.mxu0 0.0
        %948 = vmatprep.subr.mxu0 0.0
        %949 = vmatpush1.msra.mxu0 0.0
        %950 = vmatprep.subr.mxu0 0.0
        %951 = vmatpush1.msra.mxu0 0.0
        %952 = vmatprep.mubr.f32.mxu0 0.0
        %953 = vmatmul.mubr.f32.gmra.mrb[0].mxu0 %v617
        %v954 = vpop.f32.mrb[0].mxu0
        %v955 = vadd.f32 %v604, %v954
        %v956 = vpop.f32.mrb[0].mxu0
        %957 = vmatprep.mubr.f32.mxu0 0.0
        %958 = vmatmul.mubr.f32.gmra.mrb[0].mxu0 %v620
        %v959 = vpop.f32.mrb[0].mxu0
        %v960 = vadd.f32 %v609, %v959
        %v961 = vpop.f32.mrb[0].mxu0
        %962 = vmatprep.mubr.f32.mxu0 0.0
        %963 = vmatmul.mubr.f32.gmra.mrb[0].mxu0 %v623
        %v964 = vpop.f32.mrb[0].mxu0
        %v965 = vadd.f32 %v614, %v964
        %v966 = vpop.f32.mrb[0].mxu0
        %967 = vdwg.mxu0
        %v968 = vxor.u32 %v955, 2147483648
        %v969 = vxor.u32 %v960, 2147483648
        %v970 = vxor.u32 %v965, 2147483648
        %v971 = vmul.f32 %v968, 1.442695
        %v972 = vpow.pop %v971
        %v973 = vmul.f32 %v969, 1.442695
        %v974 = vpow.pop %v973
        %v975 = vmul.f32 %v970, 1.442695
        %v976 = vpow.pop %v975
        %v977 = vadd.f32 %v972, 1.0
        %v978 = vadd.f32 %v974, 1.0
        %v979 = vadd.f32 %v976, 1.0
        %v980 = vrcp.pop %v977
        %v981 = vmul.f32 1.0, %v980
        %v982 = vrcp.pop %v978
        %v983 = vmul.f32 1.0, %v982
        %v984 = vrcp.pop %v979
        %v985 = vmul.f32 1.0, %v984
        %s986 = scalar_lea.vmem %s380, 24 [#allocation2]
        %v987 = vld [vmem:[%s986] sm:$0xff]
        %v988 = vld [vmem:[%s986 + $0x8] sm:$0xff]
        %v989 = vld [vmem:[%s986 + $0x10] sm:$0xff]
        %v990 = vmul.f32 %v987, %v981
        %v991 = vmul.f32 %v988, %v983
        %v992 = vmul.f32 %v989, %v985
        %s993 = scalar_lea.vmem %s424, 24 [#allocation4]
        %994 = vst [vmem:[%s993] sm:$0xff] %v990
        %995 = vst [vmem:[%s993 + $0x8] sm:$0xff] %v991
        %996 = vst [vmem:[%s993 + $0x10] sm:$0xff] %v992
        %s997 = sand.u32 %s210, 1
        %s998 = sand.u32 %s210, 1
        %s999 = smul.addr %s998, 48
        %s1000 = scalar_lea.vmem [#allocation4], %s999
        // Predicated region
        $region129: #{_lambda_.7} parent=119 // pred_check
          %p1001 = pneg %p220
        $region130: #{_lambda_.7} parent=119 // pred_check_branch
          %1003 = sbr.rel (%p1001) target = $region132
        $region131: #{_lambda_.7} parent=119 // pred_region
          %s1004 = smul.addr %s19, 8
          %s1005 = scalar_lea.vmem %s8, %s1004
          // Predicated region
          $region133: #{_lambda_.7} parent=131 // pred_check
            _
          $region134: #{_lambda_.7} parent=131 // pred_check_branch
            %1007 = sbr.rel (0) target = $region136
          $region135: #{_lambda_.7} parent=131 // pred_region
            // Predicated region
            $region137: #{_lambda_.7} parent=135 // pred_check
              _
            $region138: #{_lambda_.7} parent=135 // pred_check_branch
              %1009 = sbr.rel (0) target = $region140
            $region139: #{_lambda_.7} parent=135 // pred_region
              // Predicated region
              $region152: #{_lambda_.7} parent=139 // pred_check
                _
              $region153: #{_lambda_.7} parent=139 // pred_check_branch
                %1034 = sbr.rel (0) target = $region155
              $region154: #{_lambda_.7} parent=139 // pred_region
                loop: start=0, step=1, limit=1
                $region156: #{_lambda_.7} parent=154 // loop_pre_header
                  _
                $region157: #{_lambda_.7} parent=154 // loop_header
                  %s1036 = sphi 0, %s1040
                  %p1037 = scmp.ge.s32.totalorder %s1036, 1
                  %s1041 = sphi %s1000, %s1000
                  %s1042 = sphi %s1005, %s1005
                $region158: #{_lambda_.7} parent=154 // loop_header_branch
                  %1039 = sbr.rel (%p1037) target = $region162
                $region159: #{_lambda_.7} parent=154 // loop_body
                  %v1043 = vld [vmem:[%s1041] sm:$0xff]
                  %1044 = vst [vmem:[%s1042] sm:$0xff] %v1043
                  %v1045 = vld [vmem:[%s1041 + $0x8] sm:$0xff]
                  %1046 = vst [vmem:[%s1042 + $0x10] sm:$0xff] %v1045
                  %v1047 = vld [vmem:[%s1041 + $0x10] sm:$0xff]
                  %1048 = vst [vmem:[%s1042 + $0x20] sm:$0xff] %v1047
                  %v1049 = vld [vmem:[%s1041 + $0x18] sm:$0xff]
                  %1050 = vst [vmem:[%s1042 + $0x30] sm:$0xff] %v1049
                  %v1051 = vld [vmem:[%s1041 + $0x20] sm:$0xff]
                  %1052 = vst [vmem:[%s1042 + $0x40] sm:$0xff] %v1051
                  %v1053 = vld [vmem:[%s1041 + $0x28] sm:$0xff]
                  %1054 = vst [vmem:[%s1042 + $0x50] sm:$0xff] %v1053
                $region160: #{_lambda_.7} parent=154 // loop_footer
                  %s1040 = sadd.s32 1, %s1036
                $region161: #{_lambda_.7} parent=154 // loop_footer_branch
                  %1035 = sbr.rel target = $region157
                $region162: #{_lambda_.7} parent=154 // loop_exit
                  _
              $region155: #{_lambda_.7} parent=139 // pred_fallthru
                _
              // Predicated region
              $region163: #{_lambda_.7} parent=139 // pred_check
                _
              $region164: #{_lambda_.7} parent=139 // pred_check_branch
                %1056 = sbr.rel target = $region166
              $region165: #{_lambda_.7} parent=139 // pred_region
                _
              $region166: #{_lambda_.7} parent=139 // pred_fallthru
                _
            $region140: #{_lambda_.7} parent=135 // pred_fallthru
              _
            // Predicated region
            $region141: #{_lambda_.7} parent=135 // pred_check
              _
            $region142: #{_lambda_.7} parent=135 // pred_check_branch
              %1011 = sbr.rel target = $region144
            $region143: #{_lambda_.7} parent=135 // pred_region
              loop: start=0, step=1, limit=1
              $region145: #{_lambda_.7} parent=143 // loop_pre_header
                _
              $region146: #{_lambda_.7} parent=143 // loop_header
                %s1014 = sphi 0, %s1018
                %p1015 = scmp.ge.s32.totalorder %s1014, 1
                %s1019 = sphi %s1000, %s1000
                %s1020 = sphi %s1005, %s1005
              $region147: #{_lambda_.7} parent=143 // loop_header_branch
                %1017 = sbr.rel (%p1015) target = $region151
              $region148: #{_lambda_.7} parent=143 // loop_body
                %v1021 = vld [vmem:[%s1019] sm:$0xff]
                %1022 = vst [vmem:[%s1020] sm:$0xff] %v1021
                %v1023 = vld [vmem:[%s1019 + $0x8] sm:$0xff]
                %1024 = vst [vmem:[%s1020 + $0x10] sm:$0xff] %v1023
                %v1025 = vld [vmem:[%s1019 + $0x10] sm:$0xff]
                %1026 = vst [vmem:[%s1020 + $0x20] sm:$0xff] %v1025
                %v1027 = vld [vmem:[%s1019 + $0x18] sm:$0xff]
                %1028 = vst [vmem:[%s1020 + $0x30] sm:$0xff] %v1027
                %v1029 = vld [vmem:[%s1019 + $0x20] sm:$0xff]
                %1030 = vst [vmem:[%s1020 + $0x40] sm:$0xff] %v1029
                %v1031 = vld [vmem:[%s1019 + $0x28] sm:$0xff]
                %1032 = vst [vmem:[%s1020 + $0x50] sm:$0xff] %v1031
              $region149: #{_lambda_.7} parent=143 // loop_footer
                %s1018 = sadd.s32 1, %s1014
              $region150: #{_lambda_.7} parent=143 // loop_footer_branch
                %1013 = sbr.rel target = $region146
              $region151: #{_lambda_.7} parent=143 // loop_exit
                _
            $region144: #{_lambda_.7} parent=135 // pred_fallthru
              _
          $region136: #{_lambda_.7} parent=131 // pred_fallthru
            _
          %1057 = vnop
        $region132: #{_lambda_.7} parent=119 // pred_fallthru
          _
      $region120: #{_lambda_.7} parent=5 // pred_fallthru
        _
      %p1058 = scmp.le.s32.totalorder 2, %s14
      // Predicated region
      $region167: #{_lambda_.7} parent=5 // pred_check
        %p1059 = pneg %p1058
      $region168: #{_lambda_.7} parent=5 // pred_check_branch
        %1061 = sbr.rel (%p1059) target = $region170
      $region169: #{_lambda_.7} parent=5 // pred_region
        %s1062 = ssub.s32 %s14, 2
        // Predicated region
        $region171: #{_lambda_.7} parent=169 // pred_check
          %p1063 = pneg %p226
        $region172: #{_lambda_.7} parent=169 // pred_check_branch
          %1065 = sbr.rel (%p1063) target = $region174
        $region173: #{_lambda_.7} parent=169 // pred_region
          %s1066 = sand.u32 %s211, 1
          %s1067 = sand.u32 %s211, 1
          %s1068 = smul.addr %s1067, 48
          %s1069 = scalar_lea.vmem [#allocation4], %s1068
        $region174: #{_lambda_.7} parent=169 // pred_fallthru
          _
      $region170: #{_lambda_.7} parent=5 // pred_fallthru
        _
    $region6: #{_lambda_.7} parent=1 // loop_footer
      %s18 = sadd.s32 1, %s14
    $region7: #{_lambda_.7} parent=1 // loop_footer_branch
      %13 = sbr.rel target = $region3
    $region8: #{_lambda_.7} parent=1 // loop_exit
      _

</llo_original>
